<compile_context>
chip_gen: v6e
topology: v6e:2x2x1
jax: 0.10.0
libtpu: 0.0.40
codegen_flags: <defaults>
</compile_context>

<pallas_src>
import functools

import jax
import jax.numpy as jnp
from jax.experimental import pallas as pl
from jax.experimental.pallas import tpu as pltpu


def _round_up(x, m):
    return (x + m - 1) // m * m


def _mlp_fused_kernel(*refs, n_layers):
    """Fused MLP forward on one batch tile.

    refs = (x_ref, w0, b0, w1, b1, ..., w_{L-1}, b_{L-1}, o_ref)
    Intermediate activations never leave vregs/VMEM; only o_ref hits HBM.
    """
    x_ref = refs[0]
    o_ref = refs[-1]
    wb = refs[1:-1]

    h = x_ref[...]                                    # (tb, Fin) bf16
    for i in range(n_layers):
        w = wb[2 * i][...]                            # (fin_p, fout_p) bf16
        b = wb[2 * i + 1][...]                        # (1, fout_p)     f32
        y = jnp.dot(h, w, preferred_element_type=jnp.float32) + b
        if i < n_layers - 1:
            # ReLU on the f32 accumulator, store the activation as bf16.
            h = jnp.maximum(y, 0.0).astype(jnp.bfloat16)
        else:
            # sigmoid(y) = 1 / (1 + exp(-y)); exp and approx reciprocal both
            # run on the EUP slot.  exp overflow -> inf -> vrcp(inf) = 0,
            # which is the correct saturated sigmoid value.
            h = pl.reciprocal(1.0 + jnp.exp(-y), approx=True)
    o_ref[...] = h.astype(o_ref.dtype)


def prepare_params(params):
    """One-time prep (call once, outside the forward pass / jit body):

    * cast weights to bf16,
    * pad every fan-out dim to a multiple of 128 lanes (zero cols / zero bias
      are mathematically inert),
    * pad fan-in rows of layer i>0 to match the previous padded fan-out.
    The first layer keeps its real fan-in so x can be passed unpadded.
    Returns (padded_layers, real_dims).
    """
    padded = []
    real_dims = []
    prev_cols = params[0][0].shape[0]                 # real input_dim
    for (w, b) in params:
        fin, fout = w.shape
        assert fin <= prev_cols
        fout_p = _round_up(fout, 128)
        w_p = jnp.zeros((prev_cols, fout_p), jnp.bfloat16)
        w_p = w_p.at[:fin, :fout].set(w.astype(jnp.bfloat16))
        b_p = jnp.zeros((1, fout_p), jnp.float32).at[0, :fout].set(
            b.astype(jnp.float32))
        padded.append((w_p, b_p))
        real_dims.append((fin, fout))
        prev_cols = fout_p
    return padded, real_dims


def nn_forward(prepared, x, *, batch_tile=512):
    """Fused forward pass of the NN module as a single Pallas kernel.

    prepared: output of prepare_params(params).
    x:        [B, input_dim] f32 (or bf16).
    Returns   [B, output_dim] f32.
    """
    padded, real_dims = prepared
    n_layers = len(padded)
    B, Fin = x.shape
    assert Fin == real_dims[0][0]
    Fout = real_dims[-1][1]
    Fout_p = padded[-1][0].shape[1]

    # ---- batch tiling -------------------------------------------------------
    B_r = _round_up(B, 8)
    tb = max(8, min(_round_up(batch_tile, 8), B_r))
    # Keep >= 2 grid steps when possible so v7x's 2 TensorCores both get work.
    if B_r >= 16 and tb >= B_r:
        tb = _round_up((B_r + 1) // 2, 8)
    B_p = _round_up(B, tb)
    grid = (B_p // tb,)

    # x: bf16, unpadded features; pad batch rows only if needed.
    x_bf = x.astype(jnp.bfloat16)
    if B_p != B:
        x_bf = jnp.pad(x_bf, ((0, B_p - B), (0, 0)))

    flat_inputs = [x_bf]
    for (w_p, b_p) in padded:
        flat_inputs += [w_p, b_p]

    # ---- VMEM budget / residency guard -------------------------------------
    resident = sum(int(w.size) * w.dtype.itemsize + int(b.size) * b.dtype.itemsize
                   for (w, b) in padded)
    io_per_step = tb * Fin * 2 + tb * Fout_p * 2          # bf16 x + bf16 out
    vmem_need = 2 * resident + 2 * io_per_step             # worst case: all 2x-buffered
    try:
        vmem_cap = int(pltpu.get_tpu_info().vmem_capacity_bytes)
    except Exception:
        vmem_cap = 64 * 1024 * 1024                         # v7x per-TC worst case
    if vmem_need > (2 * vmem_cap) // 3:
        # TODO(synk): add a fout/fin-tiled accumulator fallback (grid over the
        # reduction axis + pl.when init/finalize) for MLPs too big to keep
        # fully VMEM-resident (relevant mainly on v7x's 64 MiB VMEM).
        raise NotImplementedError(
            "MLP weights too large to keep fully VMEM-resident on this chip")
    vmem_limit = int(min(vmem_cap, max(32 << 20, vmem_need + (4 << 20))))

    # ---- cost estimate (UNPADDED work) --------------------------------------
    flops = sum(2 * B * fin * fout for (fin, fout) in real_dims)
    bytes_accessed = (B * Fin * 2
                      + sum(fin * fout * 2 + fout * 4 for (fin, fout) in real_dims)
                      + B * Fout * 2)
    cost = pl.CostEstimate(flops=flops, transcendentals=B * Fout,
                           bytes_accessed=bytes_accessed)

    # ---- specs + call --------------------------------------------------------
    def run(single_buffer_weights):
        wkw = {}
        if single_buffer_weights and hasattr(pl, "Buffered"):
            # Constant block index across the grid -> never re-fetched; single
            # buffering halves their VMEM footprint (matters on v7x's 64 MiB).
            wkw = dict(pipeline_mode=pl.Buffered(1))
        in_specs = [pl.BlockSpec((tb, Fin), lambda i: (i, 0))]
        for (w_p, b_p) in padded:
            in_specs.append(pl.BlockSpec(w_p.shape, lambda i: (0, 0), **wkw))
            in_specs.append(pl.BlockSpec(b_p.shape, lambda i: (0, 0), **wkw))
        out_specs = pl.BlockSpec((tb, Fout_p), lambda i: (i, 0))
        return pl.pallas_call(
            functools.partial(_mlp_fused_kernel, n_layers=n_layers),
            out_shape=jax.ShapeDtypeStruct((B_p, Fout_p), jnp.bfloat16),
            grid=grid,
            in_specs=in_specs,
            out_specs=out_specs,
            compiler_params=pltpu.CompilerParams(
                dimension_semantics=("parallel",),   # independent batch tiles
                vmem_limit_bytes=vmem_limit,
            ),
            cost_estimate=cost,
        )(*flat_inputs)

    try:
        out_p = run(True)
    except Exception:
        # Fallback: identical kernel without the single-buffer hint (in case
        # this JAX/Mosaic version rejects pipeline_mode / Buffered(1)).
        out_p = run(False)

    return out_p[:B, :Fout].astype(jnp.float32)


def init_params(key, input_dim, hidden_dim, output_dim, n_layer):
    """Deterministic init mirroring the PyTorch module:
       kaiming_uniform_(relu) weights for in/hid layers, PyTorch-default
       uniform for biases and for the out layer weight."""
    n_hid = n_layer - 2
    params = []

    def kaiming_uniform(k, fan_in, fan_out):
        bound = jnp.sqrt(6.0 / fan_in)               # gain=sqrt(2) for relu
        return jax.random.uniform(k, (fan_in, fan_out), jnp.float32,
                                  minval=-bound, maxval=bound)

    def default_uniform(k, shape, fan_in):
        bound = 1.0 / jnp.sqrt(fan_in)
        return jax.random.uniform(k, shape, jnp.float32,
                                  minval=-bound, maxval=bound)

    dims = [(input_dim, hidden_dim)] + [(hidden_dim, hidden_dim)] * n_hid
    for (fin, fout) in dims:
        key, kw, kb = jax.random.split(key, 3)
        params.append((kaiming_uniform(kw, fin, fout),
                       default_uniform(kb, (fout,), fin)))

    key, kw, kb = jax.random.split(key, 3)
    params.append((default_uniform(kw, (hidden_dim, output_dim), hidden_dim),
                   default_uniform(kb, (output_dim,), hidden_dim)))
    return params


def nn_forward_ref_f32(params, x):
    """Plain-JAX full-f32 reference (true module semantics)."""
    h = x
    for i in range(len(params) - 1):
        w, b = params[i]
        h = jnp.maximum(h @ w + b, 0.0)
    w, b = params[-1]
    return jax.nn.sigmoid(h @ w + b)


def nn_forward_ref_bf16(params, x):
    """Reference with the same bf16 operand / f32 accumulate math as the kernel."""
    h = x.astype(jnp.bfloat16)
    for i, (w, b) in enumerate(params):
        y = jnp.dot(h, w.astype(jnp.bfloat16),
                    preferred_element_type=jnp.float32) + b
        if i < len(params) - 1:
            h = jnp.maximum(y, 0.0).astype(jnp.bfloat16)
        else:
            h = jax.nn.sigmoid(y)
    return h.astype(jnp.float32)


if __name__ == "__main__":
    # Small shapes consistent with the module: batch=64, input_dim=32,
    # hidden_dim=32, output_dim=16, n_layer=4 (=> 2 hidden layers).
    # batch_tile default 512 gets capped to 32 so grid=(2,) and the parallel
    # batch axis is exercised.
    B, input_dim, hidden_dim, output_dim, n_layer = 64, 32, 32, 16, 4

    key = jax.random.PRNGKey(0)
    key, kx = jax.random.split(key)
    x = jax.random.normal(kx, (B, input_dim), jnp.float32)

    params = init_params(key, input_dim, hidden_dim, output_dim, n_layer)
    prepared = prepare_params(params)        # one-time pad + bf16 cast (hoisted)

    out = nn_forward(prepared, x)
    out = jax.block_until_ready(out)
    assert out.shape == (B, output_dim)

    # Tight check vs. a reference doing the same bf16 math (residual diff =
    # approx reciprocal in the sigmoid + bf16 rounding of the stored output).
    ref_bf16 = nn_forward_ref_bf16(params, x)
    assert jnp.allclose(out, ref_bf16, atol=1.5e-2, rtol=1.5e-2), \
        "mismatch vs bf16-matched reference"

    # Sanity check vs. the exact f32 module semantics (bf16 quantization
    # loosens the tolerance).
    ref_f32 = nn_forward_ref_f32(params, x)
    assert jnp.allclose(out, ref_f32, atol=6e-2, rtol=6e-2), \
        "mismatch vs f32 reference"

    print("KERNEL_OK")
</pallas_src>

<mosaic_0001>
module attributes {stable_mosaic.version = 11 : i64} {
  func.func @_mlp_fused_kernel(%arg0: i32, %arg1: memref<32x32xbf16, #tpu.memory_space<vmem>>, %arg2: memref<32x128xbf16, #tpu.memory_space<vmem>>, %arg3: memref<1x128xf32, #tpu.memory_space<vmem>>, %arg4: memref<128x128xbf16, #tpu.memory_space<vmem>>, %arg5: memref<1x128xf32, #tpu.memory_space<vmem>>, %arg6: memref<128x128xbf16, #tpu.memory_space<vmem>>, %arg7: memref<1x128xf32, #tpu.memory_space<vmem>>, %arg8: memref<128x128xbf16, #tpu.memory_space<vmem>>, %arg9: memref<1x128xf32, #tpu.memory_space<vmem>>, %arg10: memref<32x128xbf16, #tpu.memory_space<vmem>>) attributes {dimension_semantics = [#tpu.dimension_semantics<parallel>], iteration_bounds = array<i64: 2>, scalar_prefetch = 0 : i64, scratch_operands = 0 : i64, tpu.core_type = #tpu.core_type<tc>, window_params = [{transform_indices = @transform_0, window_bounds = array<i64: 32, 32>}, {pipeline_mode = #tpu.pipeline_mode<synchronous>, transform_indices = @transform_1, window_bounds = array<i64: 32, 128>}, {pipeline_mode = #tpu.pipeline_mode<synchronous>, transform_indices = @transform_2, window_bounds = array<i64: 1, 128>}, {pipeline_mode = #tpu.pipeline_mode<synchronous>, transform_indices = @transform_3, window_bounds = array<i64: 128, 128>}, {pipeline_mode = #tpu.pipeline_mode<synchronous>, transform_indices = @transform_4, window_bounds = array<i64: 1, 128>}, {pipeline_mode = #tpu.pipeline_mode<synchronous>, transform_indices = @transform_5, window_bounds = array<i64: 128, 128>}, {pipeline_mode = #tpu.pipeline_mode<synchronous>, transform_indices = @transform_6, window_bounds = array<i64: 1, 128>}, {pipeline_mode = #tpu.pipeline_mode<synchronous>, transform_indices = @transform_7, window_bounds = array<i64: 128, 128>}, {pipeline_mode = #tpu.pipeline_mode<synchronous>, transform_indices = @transform_8, window_bounds = array<i64: 1, 128>}, {transform_indices = @transform_9, window_bounds = array<i64: 32, 128>}]} {
    %c0 = arith.constant 0 : index
    %c0_0 = arith.constant 0 : index
    %0 = vector.load %arg1[%c0, %c0_0] : memref<32x32xbf16, #tpu.memory_space<vmem>>, vector<32x32xbf16>
    %c0_1 = arith.constant 0 : index
    %c0_2 = arith.constant 0 : index
    %1 = vector.load %arg2[%c0_1, %c0_2] : memref<32x128xbf16, #tpu.memory_space<vmem>>, vector<32x128xbf16>
    %c0_3 = arith.constant 0 : index
    %c0_4 = arith.constant 0 : index
    %2 = vector.load %arg3[%c0_3, %c0_4] : memref<1x128xf32, #tpu.memory_space<vmem>>, vector<1x128xf32>
    %cst = arith.constant dense<0.000000e+00> : vector<32x128xf32>
    %3 = tpu.matmul %0, %1, %cst {dimension_numbers = #tpu.dot_dimension_numbers<[1], [0], [0], [1], [0, 0, 1, 1], [], []>} : vector<32x32xbf16>, vector<32x128xbf16>, vector<32x128xf32> -> vector<32x128xf32>
    %4 = vector.broadcast %2 : vector<1x128xf32> to vector<32x128xf32>
    %5 = arith.addf %3, %4 : vector<32x128xf32>
    %cst_5 = arith.constant 0.000000e+00 : f32
    %6 = vector.broadcast %cst_5 : f32 to vector<32x128xf32>
    %7 = arith.maximumf %5, %6 : vector<32x128xf32>
    %8 = arith.truncf %7 : vector<32x128xf32> to vector<32x128xbf16>
    %c0_6 = arith.constant 0 : index
    %c0_7 = arith.constant 0 : index
    %9 = vector.load %arg4[%c0_6, %c0_7] : memref<128x128xbf16, #tpu.memory_space<vmem>>, vector<128x128xbf16>
    %c0_8 = arith.constant 0 : index
    %c0_9 = arith.constant 0 : index
    %10 = vector.load %arg5[%c0_8, %c0_9] : memref<1x128xf32, #tpu.memory_space<vmem>>, vector<1x128xf32>
    %cst_10 = arith.constant dense<0.000000e+00> : vector<32x128xf32>
    %11 = tpu.matmul %8, %9, %cst_10 {dimension_numbers = #tpu.dot_dimension_numbers<[1], [0], [0], [1], [0, 0, 1, 1], [], []>} : vector<32x128xbf16>, vector<128x128xbf16>, vector<32x128xf32> -> vector<32x128xf32>
    %12 = vector.broadcast %10 : vector<1x128xf32> to vector<32x128xf32>
    %13 = arith.addf %11, %12 : vector<32x128xf32>
    %cst_11 = arith.constant 0.000000e+00 : f32
    %14 = vector.broadcast %cst_11 : f32 to vector<32x128xf32>
    %15 = arith.maximumf %13, %14 : vector<32x128xf32>
    %16 = arith.truncf %15 : vector<32x128xf32> to vector<32x128xbf16>
    %c0_12 = arith.constant 0 : index
    %c0_13 = arith.constant 0 : index
    %17 = vector.load %arg6[%c0_12, %c0_13] : memref<128x128xbf16, #tpu.memory_space<vmem>>, vector<128x128xbf16>
    %c0_14 = arith.constant 0 : index
    %c0_15 = arith.constant 0 : index
    %18 = vector.load %arg7[%c0_14, %c0_15] : memref<1x128xf32, #tpu.memory_space<vmem>>, vector<1x128xf32>
    %cst_16 = arith.constant dense<0.000000e+00> : vector<32x128xf32>
    %19 = tpu.matmul %16, %17, %cst_16 {dimension_numbers = #tpu.dot_dimension_numbers<[1], [0], [0], [1], [0, 0, 1, 1], [], []>} : vector<32x128xbf16>, vector<128x128xbf16>, vector<32x128xf32> -> vector<32x128xf32>
    %20 = vector.broadcast %18 : vector<1x128xf32> to vector<32x128xf32>
    %21 = arith.addf %19, %20 : vector<32x128xf32>
    %cst_17 = arith.constant 0.000000e+00 : f32
    %22 = vector.broadcast %cst_17 : f32 to vector<32x128xf32>
    %23 = arith.maximumf %21, %22 : vector<32x128xf32>
    %24 = arith.truncf %23 : vector<32x128xf32> to vector<32x128xbf16>
    %c0_18 = arith.constant 0 : index
    %c0_19 = arith.constant 0 : index
    %25 = vector.load %arg8[%c0_18, %c0_19] : memref<128x128xbf16, #tpu.memory_space<vmem>>, vector<128x128xbf16>
    %c0_20 = arith.constant 0 : index
    %c0_21 = arith.constant 0 : index
    %26 = vector.load %arg9[%c0_20, %c0_21] : memref<1x128xf32, #tpu.memory_space<vmem>>, vector<1x128xf32>
    %cst_22 = arith.constant dense<0.000000e+00> : vector<32x128xf32>
    %27 = tpu.matmul %24, %25, %cst_22 {dimension_numbers = #tpu.dot_dimension_numbers<[1], [0], [0], [1], [0, 0, 1, 1], [], []>} : vector<32x128xbf16>, vector<128x128xbf16>, vector<32x128xf32> -> vector<32x128xf32>
    %28 = vector.broadcast %26 : vector<1x128xf32> to vector<32x128xf32>
    %29 = arith.addf %27, %28 : vector<32x128xf32>
    %cst_23 = arith.constant 0.000000e+00 : f32
    %30 = vector.broadcast %cst_23 : f32 to vector<32x128xf32>
    %31 = arith.subf %30, %29 : vector<32x128xf32>
    %32 = math.exp %31 : vector<32x128xf32>
    %cst_24 = arith.constant 1.000000e+00 : f32
    %33 = vector.broadcast %cst_24 : f32 to vector<32x128xf32>
    %34 = arith.addf %33, %32 : vector<32x128xf32>
    %35 = tpu.reciprocal %34 {approx = true} : vector<32x128xf32> -> vector<32x128xf32>
    %36 = arith.truncf %35 : vector<32x128xf32> to vector<32x128xbf16>
    %c0_25 = arith.constant 0 : index
    %c0_26 = arith.constant 0 : index
    %37 = vector.load %arg10[%c0_25, %c0_26] : memref<32x128xbf16, #tpu.memory_space<vmem>>, vector<32x128xbf16>
    tpu.vector_store %arg10[%c0_25, %c0_26], %36 {strides = array<i32>} : memref<32x128xbf16, #tpu.memory_space<vmem>>, vector<32x128xbf16>,
    return
  }
  func.func @transform_0(%arg0: i32) -> (i32, i32) {
    %c0_i32 = arith.constant 0 : i32
    %c0_i32_0 = arith.constant 0 : i32
    return %arg0, %c0_i32 : i32, i32
  }
  func.func @transform_1(%arg0: i32) -> (i32, i32) {
    %c0_i32 = arith.constant 0 : i32
    %c0_i32_0 = arith.constant 0 : i32
    %c0_i32_1 = arith.constant 0 : i32
    return %c0_i32, %c0_i32_0 : i32, i32
  }
  func.func @transform_2(%arg0: i32) -> (i32, i32) {
    %c0_i32 = arith.constant 0 : i32
    %c0_i32_0 = arith.constant 0 : i32
    %c0_i32_1 = arith.constant 0 : i32
    return %c0_i32, %c0_i32_0 : i32, i32
  }
  func.func @transform_3(%arg0: i32) -> (i32, i32) {
    %c0_i32 = arith.constant 0 : i32
    %c0_i32_0 = arith.constant 0 : i32
    %c0_i32_1 = arith.constant 0 : i32
    return %c0_i32, %c0_i32_0 : i32, i32
  }
  func.func @transform_4(%arg0: i32) -> (i32, i32) {
    %c0_i32 = arith.constant 0 : i32
    %c0_i32_0 = arith.constant 0 : i32
    %c0_i32_1 = arith.constant 0 : i32
    return %c0_i32, %c0_i32_0 : i32, i32
  }
  func.func @transform_5(%arg0: i32) -> (i32, i32) {
    %c0_i32 = arith.constant 0 : i32
    %c0_i32_0 = arith.constant 0 : i32
    %c0_i32_1 = arith.constant 0 : i32
    return %c0_i32, %c0_i32_0 : i32, i32
  }
  func.func @transform_6(%arg0: i32) -> (i32, i32) {
    %c0_i32 = arith.constant 0 : i32
    %c0_i32_0 = arith.constant 0 : i32
    %c0_i32_1 = arith.constant 0 : i32
    return %c0_i32, %c0_i32_0 : i32, i32
  }
  func.func @transform_7(%arg0: i32) -> (i32, i32) {
    %c0_i32 = arith.constant 0 : i32
    %c0_i32_0 = arith.constant 0 : i32
    %c0_i32_1 = arith.constant 0 : i32
    return %c0_i32, %c0_i32_0 : i32, i32
  }
  func.func @transform_8(%arg0: i32) -> (i32, i32) {
    %c0_i32 = arith.constant 0 : i32
    %c0_i32_0 = arith.constant 0 : i32
    %c0_i32_1 = arith.constant 0 : i32
    return %c0_i32, %c0_i32_0 : i32, i32
  }
  func.func @transform_9(%arg0: i32) -> (i32, i32) {
    %c0_i32 = arith.constant 0 : i32
    %c0_i32_0 = arith.constant 0 : i32
    return %arg0, %c0_i32 : i32, i32
  }
}

module attributes {stable_mosaic.version = 11 : i64} {
  func.func @_mlp_fused_kernel(%arg0: i32, %arg1: memref<32x32xbf16, #tpu.memory_space<vmem>>, %arg2: memref<32x128xbf16, #tpu.memory_space<vmem>>, %arg3: memref<1x128xf32, #tpu.memory_space<vmem>>, %arg4: memref<128x128xbf16, #tpu.memory_space<vmem>>, %arg5: memref<1x128xf32, #tpu.memory_space<vmem>>, %arg6: memref<128x128xbf16, #tpu.memory_space<vmem>>, %arg7: memref<1x128xf32, #tpu.memory_space<vmem>>, %arg8: memref<128x128xbf16, #tpu.memory_space<vmem>>, %arg9: memref<1x128xf32, #tpu.memory_space<vmem>>, %arg10: memref<32x128xbf16, #tpu.memory_space<vmem>>) attributes {dimension_semantics = [#tpu.dimension_semantics<parallel>], iteration_bounds = array<i64: 2>, scalar_prefetch = 0 : i64, scratch_operands = 0 : i64, tpu.core_type = #tpu.core_type<tc>, window_params = [{transform_indices = @transform_0, window_bounds = array<i64: 32, 32>}, {pipeline_mode = #tpu.pipeline_mode<synchronous>, transform_indices = @transform_1, window_bounds = array<i64: 32, 128>}, {pipeline_mode = #tpu.pipeline_mode<synchronous>, transform_indices = @transform_2, window_bounds = array<i64: 1, 128>}, {pipeline_mode = #tpu.pipeline_mode<synchronous>, transform_indices = @transform_3, window_bounds = array<i64: 128, 128>}, {pipeline_mode = #tpu.pipeline_mode<synchronous>, transform_indices = @transform_4, window_bounds = array<i64: 1, 128>}, {pipeline_mode = #tpu.pipeline_mode<synchronous>, transform_indices = @transform_5, window_bounds = array<i64: 128, 128>}, {pipeline_mode = #tpu.pipeline_mode<synchronous>, transform_indices = @transform_6, window_bounds = array<i64: 1, 128>}, {pipeline_mode = #tpu.pipeline_mode<synchronous>, transform_indices = @transform_7, window_bounds = array<i64: 128, 128>}, {pipeline_mode = #tpu.pipeline_mode<synchronous>, transform_indices = @transform_8, window_bounds = array<i64: 1, 128>}, {transform_indices = @transform_9, window_bounds = array<i64: 32, 128>}]} {
    %c0 = arith.constant 0 : index
    %c0_0 = arith.constant 0 : index
    %0 = vector.load %arg1[%c0, %c0_0] : memref<32x32xbf16, #tpu.memory_space<vmem>>, vector<32x32xbf16>
    %c0_1 = arith.constant 0 : index
    %c0_2 = arith.constant 0 : index
    %1 = vector.load %arg2[%c0_1, %c0_2] : memref<32x128xbf16, #tpu.memory_space<vmem>>, vector<32x128xbf16>
    %c0_3 = arith.constant 0 : index
    %c0_4 = arith.constant 0 : index
    %2 = vector.load %arg3[%c0_3, %c0_4] : memref<1x128xf32, #tpu.memory_space<vmem>>, vector<1x128xf32>
    %cst = arith.constant dense<0.000000e+00> : vector<32x128xf32>
    %3 = tpu.matmul %0, %1, %cst {dimension_numbers = #tpu.dot_dimension_numbers<[1], [0], [0], [1], [0, 0, 1, 1], [], []>} : vector<32x32xbf16>, vector<32x128xbf16>, vector<32x128xf32> -> vector<32x128xf32>
    %4 = vector.broadcast %2 : vector<1x128xf32> to vector<32x128xf32>
    %5 = arith.addf %3, %4 : vector<32x128xf32>
    %cst_5 = arith.constant 0.000000e+00 : f32
    %6 = vector.broadcast %cst_5 : f32 to vector<32x128xf32>
    %7 = arith.maximumf %5, %6 : vector<32x128xf32>
    %8 = arith.truncf %7 : vector<32x128xf32> to vector<32x128xbf16>
    %c0_6 = arith.constant 0 : index
    %c0_7 = arith.constant 0 : index
    %9 = vector.load %arg4[%c0_6, %c0_7] : memref<128x128xbf16, #tpu.memory_space<vmem>>, vector<128x128xbf16>
    %c0_8 = arith.constant 0 : index
    %c0_9 = arith.constant 0 : index
    %10 = vector.load %arg5[%c0_8, %c0_9] : memref<1x128xf32, #tpu.memory_space<vmem>>, vector<1x128xf32>
    %cst_10 = arith.constant dense<0.000000e+00> : vector<32x128xf32>
    %11 = tpu.matmul %8, %9, %cst_10 {dimension_numbers = #tpu.dot_dimension_numbers<[1], [0], [0], [1], [0, 0, 1, 1], [], []>} : vector<32x128xbf16>, vector<128x128xbf16>, vector<32x128xf32> -> vector<32x128xf32>
    %12 = vector.broadcast %10 : vector<1x128xf32> to vector<32x128xf32>
    %13 = arith.addf %11, %12 : vector<32x128xf32>
    %cst_11 = arith.constant 0.000000e+00 : f32
    %14 = vector.broadcast %cst_11 : f32 to vector<32x128xf32>
    %15 = arith.maximumf %13, %14 : vector<32x128xf32>
    %16 = arith.truncf %15 : vector<32x128xf32> to vector<32x128xbf16>
    %c0_12 = arith.constant 0 : index
    %c0_13 = arith.constant 0 : index
    %17 = vector.load %arg6[%c0_12, %c0_13] : memref<128x128xbf16, #tpu.memory_space<vmem>>, vector<128x128xbf16>
    %c0_14 = arith.constant 0 : index
    %c0_15 = arith.constant 0 : index
    %18 = vector.load %arg7[%c0_14, %c0_15] : memref<1x128xf32, #tpu.memory_space<vmem>>, vector<1x128xf32>
    %cst_16 = arith.constant dense<0.000000e+00> : vector<32x128xf32>
    %19 = tpu.matmul %16, %17, %cst_16 {dimension_numbers = #tpu.dot_dimension_numbers<[1], [0], [0], [1], [0, 0, 1, 1], [], []>} : vector<32x128xbf16>, vector<128x128xbf16>, vector<32x128xf32> -> vector<32x128xf32>
    %20 = vector.broadcast %18 : vector<1x128xf32> to vector<32x128xf32>
    %21 = arith.addf %19, %20 : vector<32x128xf32>
    %cst_17 = arith.constant 0.000000e+00 : f32
    %22 = vector.broadcast %cst_17 : f32 to vector<32x128xf32>
    %23 = arith.maximumf %21, %22 : vector<32x128xf32>
    %24 = arith.truncf %23 : vector<32x128xf32> to vector<32x128xbf16>
    %c0_18 = arith.constant 0 : index
    %c0_19 = arith.constant 0 : index
    %25 = vector.load %arg8[%c0_18, %c0_19] : memref<128x128xbf16, #tpu.memory_space<vmem>>, vector<128x128xbf16>
    %c0_20 = arith.constant 0 : index
    %c0_21 = arith.constant 0 : index
    %26 = vector.load %arg9[%c0_20, %c0_21] : memref<1x128xf32, #tpu.memory_space<vmem>>, vector<1x128xf32>
    %cst_22 = arith.constant dense<0.000000e+00> : vector<32x128xf32>
    %27 = tpu.matmul %24, %25, %cst_22 {dimension_numbers = #tpu.dot_dimension_numbers<[1], [0], [0], [1], [0, 0, 1, 1], [], []>} : vector<32x128xbf16>, vector<128x128xbf16>, vector<32x128xf32> -> vector<32x128xf32>
    %28 = vector.broadcast %26 : vector<1x128xf32> to vector<32x128xf32>
    %29 = arith.addf %27, %28 : vector<32x128xf32>
    %cst_23 = arith.constant 0.000000e+00 : f32
    %30 = vector.broadcast %cst_23 : f32 to vector<32x128xf32>
    %31 = arith.subf %30, %29 : vector<32x128xf32>
    %32 = math.exp %31 : vector<32x128xf32>
    %cst_24 = arith.constant 1.000000e+00 : f32
    %33 = vector.broadcast %cst_24 : f32 to vector<32x128xf32>
    %34 = arith.addf %33, %32 : vector<32x128xf32>
    %35 = tpu.reciprocal %34 {approx = true} : vector<32x128xf32> -> vector<32x128xf32>
    %36 = arith.truncf %35 : vector<32x128xf32> to vector<32x128xbf16>
    %c0_25 = arith.constant 0 : index
    %c0_26 = arith.constant 0 : index
    %37 = vector.load %arg10[%c0_25, %c0_26] : memref<32x128xbf16, #tpu.memory_space<vmem>>, vector<32x128xbf16>
    tpu.vector_store %arg10[%c0_25, %c0_26], %36 {strides = array<i32>} : memref<32x128xbf16, #tpu.memory_space<vmem>>, vector<32x128xbf16>,
    return
  }
  func.func @transform_0(%arg0: i32) -> (i32, i32) {
    %c0_i32 = arith.constant 0 : i32
    %c0_i32_0 = arith.constant 0 : i32
    return %arg0, %c0_i32 : i32, i32
  }
  func.func @transform_1(%arg0: i32) -> (i32, i32) {
    %c0_i32 = arith.constant 0 : i32
    %c0_i32_0 = arith.constant 0 : i32
    %c0_i32_1 = arith.constant 0 : i32
    return %c0_i32, %c0_i32_0 : i32, i32
  }
  func.func @transform_2(%arg0: i32) -> (i32, i32) {
    %c0_i32 = arith.constant 0 : i32
    %c0_i32_0 = arith.constant 0 : i32
    %c0_i32_1 = arith.constant 0 : i32
    return %c0_i32, %c0_i32_0 : i32, i32
  }
  func.func @transform_3(%arg0: i32) -> (i32, i32) {
    %c0_i32 = arith.constant 0 : i32
    %c0_i32_0 = arith.constant 0 : i32
    %c0_i32_1 = arith.constant 0 : i32
    return %c0_i32, %c0_i32_0 : i32, i32
  }
  func.func @transform_4(%arg0: i32) -> (i32, i32) {
    %c0_i32 = arith.constant 0 : i32
    %c0_i32_0 = arith.constant 0 : i32
    %c0_i32_1 = arith.constant 0 : i32
    return %c0_i32, %c0_i32_0 : i32, i32
  }
  func.func @transform_5(%arg0: i32) -> (i32, i32) {
    %c0_i32 = arith.constant 0 : i32
    %c0_i32_0 = arith.constant 0 : i32
    %c0_i32_1 = arith.constant 0 : i32
    return %c0_i32, %c0_i32_0 : i32, i32
  }
  func.func @transform_6(%arg0: i32) -> (i32, i32) {
    %c0_i32 = arith.constant 0 : i32
    %c0_i32_0 = arith.constant 0 : i32
    %c0_i32_1 = arith.constant 0 : i32
    return %c0_i32, %c0_i32_0 : i32, i32
  }
  func.func @transform_7(%arg0: i32) -> (i32, i32) {
    %c0_i32 = arith.constant 0 : i32
    %c0_i32_0 = arith.constant 0 : i32
    %c0_i32_1 = arith.constant 0 : i32
    return %c0_i32, %c0_i32_0 : i32, i32
  }
  func.func @transform_8(%arg0: i32) -> (i32, i32) {
    %c0_i32 = arith.constant 0 : i32
    %c0_i32_0 = arith.constant 0 : i32
    %c0_i32_1 = arith.constant 0 : i32
    return %c0_i32, %c0_i32_0 : i32, i32
  }
  func.func @transform_9(%arg0: i32) -> (i32, i32) {
    %c0_i32 = arith.constant 0 : i32
    %c0_i32_0 = arith.constant 0 : i32
    return %arg0, %c0_i32 : i32, i32
  }
}

</mosaic_0001>

<llo_original>
// kernel: tpu_custom_call.1
$region0: #{tpu_custom_call.1}
  #allocation0 [shape = 'u32[]', space=smem, size = 0x4, offset = 0x4, fixed_abs, tag = 'smem constant byte address 0x4 - core index']
  #allocation1 [shape = 'u32[144,128]{1,0:T(1,128)}', space=vmem, size = 0x12000, scoped, tag = 'internal scratch']
  %s0 = inlined_call_operand.vmem [shape: bf16[64,32], index: 0, kind: input, shape index: {}]
  %s1 = inlined_call_operand.vmem [shape: bf16[32,128], index: 1, kind: input, shape index: {}]
  %s2 = inlined_call_operand.vmem [shape: f32[1,128], index: 2, kind: input, shape index: {}]
  %s3 = inlined_call_operand.hbm [shape: bf16[128,128], index: 3, kind: input, shape index: {}]
  %s4 = inlined_call_operand.vmem [shape: f32[1,128], index: 4, kind: input, shape index: {}]
  %s5 = inlined_call_operand.hbm [shape: bf16[128,128], index: 5, kind: input, shape index: {}]
  %s6 = inlined_call_operand.vmem [shape: f32[1,128], index: 6, kind: input, shape index: {}]
  %s7 = inlined_call_operand.hbm [shape: bf16[128,128], index: 7, kind: input, shape index: {}]
  %s8 = inlined_call_operand.vmem [shape: f32[1,128], index: 8, kind: input, shape index: {}]
  %s9 = inlined_call_operand.hbm [shape: bf16[64,128], index: 9, kind: output, shape index: {}]
  %s10 = sld [smem:[#allocation0]]
  $region81: #{tpu_custom_call.1} parent=0
    _
  %s12 = ssub.s32 1, %s10
  %s13 = scalar_select 0, %s12, %s10
  $region1: #{tpu_custom_call.1} parent=0
    #allocation2 [shape = 'u8[32768]{0}', space=vmem, size = 0x8000, scoped, tag = 'input window, operand 3, single buffered']
    #allocation3 [shape = 's32[2]{0}', space=sflag, size = 0x8, scoped, tag = 'scoped memory for tpu_custom_call.1']
    #allocation4 [shape = 's32[2]{0}', space=sflag, size = 0x8, scoped, tag = 'scoped memory for tpu_custom_call.1']
    #allocation5 [shape = 'u8[32768]{0}', space=vmem, size = 0x8000, scoped, tag = 'input window, operand 5, single buffered']
    #allocation6 [shape = 's32[1]{0}', space=sflag, size = 0x4, scoped, tag = 'scoped memory for tpu_custom_call.1']
    #allocation7 [shape = 'u8[32768]{0}', space=vmem, size = 0x8000, scoped, tag = 'input window, operand 7, single buffered']
    #allocation8 [shape = 'u8[16384]{0}', space=vmem, size = 0x4000, scoped, tag = 'output window, operand 0']
    %14 = vsyncpa [#allocation3], 0
    %15 = vsyncpa [#allocation6], 0
    %16 = vsyncpa [#allocation4], 0
    %s17 = scalar_lea.sflag [#allocation4], 1
    %18 = vsyncpa %s17, 0
    loop: start=0, step=1, limit=4
    $region2: #{tpu_custom_call.1} parent=1 // loop_pre_header
      _
    $region3: #{tpu_custom_call.1} parent=1 // loop_header
      %s20 = sphi 0, %s24
      %p21 = scmp.ge.s32.totalorder %s20, 4
      %s30 = sphi 0, %s32
      %s33 = sphi 0, %s30
      %s34 = sphi 0, %s33
      %s50 = sphi 0, %s34
      %s54 = sphi 0, %s54
      %s56 = sphi 0, %s54
      %s57 = sphi 0, %s56
      %s71 = sphi 0, %s57
      %s75 = sphi 0, %s75
      %s77 = sphi 0, %s75
      %s78 = sphi 0, %s77
      %s92 = sphi 0, %s78
      %s96 = sphi 0, %s96
      %s98 = sphi 0, %s96
      %s99 = sphi 0, %s98
      %s113 = sphi 0, %s99
      %s117 = sphi 0, %s117
      %s119 = sphi 0, %s117
      %s120 = sphi 0, %s119
      %s134 = sphi 0, %s120
      %s138 = sphi 0, %s138
      %s140 = sphi 0, %s138
      %s141 = sphi 0, %s140
      %s155 = sphi 0, %s141
      %s159 = sphi 0, %s159
      %s161 = sphi 0, %s159
      %s162 = sphi 0, %s161
      %s176 = sphi 0, %s162
      %s180 = sphi 0, %s180
      %s182 = sphi 0, %s180
      %s183 = sphi 0, %s182
      %s197 = sphi 0, %s183
      %s201 = sphi 0, %s201
      %s203 = sphi 0, %s201
      %s204 = sphi 0, %s203
      %s218 = sphi 0, %s204
      %s224 = sphi 0, %s226
      %s227 = sphi 0, %s224
      %s228 = sphi 0, %s227
      %s244 = sphi 0, %s228
    $region4: #{tpu_custom_call.1} parent=1 // loop_header_branch
      %23 = sbr.rel (%p21) target = $region8
    $region5: #{tpu_custom_call.1} parent=1 // loop_body
      %s25 = ssub.s32 %s20, 1
      %s26 = ssub.s32 %s20, 2
      %s27 = sadd.s32 %s20, 1
      %s28 = ssub.s32 %s20, %s27
      %p29 = scmp.eq.s32.totalorder %s28, 0
      %s31 = sadd.s32 %s30, 1
      %s32 = scalar_select %p29, %s30, %s31
      %p35 = pneg %p29
      %p36 = scmp.eq.s32.totalorder %s20, 1
      %p37 = por %p35, %p36
      %p38 = scmp.ne.s32.totalorder %s30, %s33
      %p39 = scmp.eq.s32.totalorder %s20, 0
      %p40 = por %p38, %p39
      %p41 = scmp.ne.s32.totalorder %s30, %s33
      %p42 = scmp.eq.s32.totalorder %s25, 1
      %p43 = por %p41, %p42
      %p44 = scmp.ne.s32.totalorder %s33, %s34
      %p45 = scmp.eq.s32.totalorder %s25, 0
      %p46 = por %p44, %p45
      %p47 = scmp.ne.s32.totalorder %s33, %s34
      %p48 = scmp.eq.s32.totalorder %s26, 1
      %p49 = por %p47, %p48
      %p51 = scmp.ne.s32.totalorder %s34, %s50
      %p52 = scmp.eq.s32.totalorder %s26, 0
      %p53 = por %p51, %p52
      %s55 = sadd.s32 %s54, 1
      %p58 = scmp.eq.s32.totalorder %s20, 1
      %p59 = scmp.ne.s32.totalorder %s54, %s56
      %p60 = scmp.eq.s32.totalorder %s20, 0
      %p61 = por %p59, %p60
      %p62 = scmp.ne.s32.totalorder %s54, %s56
      %p63 = scmp.eq.s32.totalorder %s25, 1
      %p64 = por %p62, %p63
      %p65 = scmp.ne.s32.totalorder %s56, %s57
      %p66 = scmp.eq.s32.totalorder %s25, 0
      %p67 = por %p65, %p66
      %p68 = scmp.ne.s32.totalorder %s56, %s57
      %p69 = scmp.eq.s32.totalorder %s26, 1
      %p70 = por %p68, %p69
      %p72 = scmp.ne.s32.totalorder %s57, %s71
      %p73 = scmp.eq.s32.totalorder %s26, 0
      %p74 = por %p72, %p73
      %s76 = sadd.s32 %s75, 1
      %p79 = scmp.eq.s32.totalorder %s20, 1
      %p80 = scmp.ne.s32.totalorder %s75, %s77
      %p81 = scmp.eq.s32.totalorder %s20, 0
      %p82 = por %p80, %p81
      %p83 = scmp.ne.s32.totalorder %s75, %s77
      %p84 = scmp.eq.s32.totalorder %s25, 1
      %p85 = por %p83, %p84
      %p86 = scmp.ne.s32.totalorder %s77, %s78
      %p87 = scmp.eq.s32.totalorder %s25, 0
      %p88 = por %p86, %p87
      %p89 = scmp.ne.s32.totalorder %s77, %s78
      %p90 = scmp.eq.s32.totalorder %s26, 1
      %p91 = por %p89, %p90
      %p93 = scmp.ne.s32.totalorder %s78, %s92
      %p94 = scmp.eq.s32.totalorder %s26, 0
      %p95 = por %p93, %p94
      %s97 = sadd.s32 %s96, 1
      %p100 = scmp.eq.s32.totalorder %s20, 1
      %p101 = scmp.ne.s32.totalorder %s96, %s98
      %p102 = scmp.eq.s32.totalorder %s20, 0
      %p103 = por %p101, %p102
      %p104 = scmp.ne.s32.totalorder %s96, %s98
      %p105 = scmp.eq.s32.totalorder %s25, 1
      %p106 = por %p104, %p105
      %p107 = scmp.ne.s32.totalorder %s98, %s99
      %p108 = scmp.eq.s32.totalorder %s25, 0
      %p109 = por %p107, %p108
      %p110 = scmp.ne.s32.totalorder %s98, %s99
      %p111 = scmp.eq.s32.totalorder %s26, 1
      %p112 = por %p110, %p111
      %p114 = scmp.ne.s32.totalorder %s99, %s113
      %p115 = scmp.eq.s32.totalorder %s26, 0
      %p116 = por %p114, %p115
      %s118 = sadd.s32 %s117, 1
      %p121 = scmp.eq.s32.totalorder %s20, 1
      %p122 = scmp.ne.s32.totalorder %s117, %s119
      %p123 = scmp.eq.s32.totalorder %s20, 0
      %p124 = por %p122, %p123
      %p125 = scmp.ne.s32.totalorder %s117, %s119
      %p126 = scmp.eq.s32.totalorder %s25, 1
      %p127 = por %p125, %p126
      %p128 = scmp.ne.s32.totalorder %s119, %s120
      %p129 = scmp.eq.s32.totalorder %s25, 0
      %p130 = por %p128, %p129
      %p131 = scmp.ne.s32.totalorder %s119, %s120
      %p132 = scmp.eq.s32.totalorder %s26, 1
      %p133 = por %p131, %p132
      %p135 = scmp.ne.s32.totalorder %s120, %s134
      %p136 = scmp.eq.s32.totalorder %s26, 0
      %p137 = por %p135, %p136
      %s139 = sadd.s32 %s138, 1
      %p142 = scmp.eq.s32.totalorder %s20, 1
      %p143 = scmp.ne.s32.totalorder %s138, %s140
      %p144 = scmp.eq.s32.totalorder %s20, 0
      %p145 = por %p143, %p144
      %p146 = scmp.ne.s32.totalorder %s138, %s140
      %p147 = scmp.eq.s32.totalorder %s25, 1
      %p148 = por %p146, %p147
      %p149 = scmp.ne.s32.totalorder %s140, %s141
      %p150 = scmp.eq.s32.totalorder %s25, 0
      %p151 = por %p149, %p150
      %p152 = scmp.ne.s32.totalorder %s140, %s141
      %p153 = scmp.eq.s32.totalorder %s26, 1
      %p154 = por %p152, %p153
      %p156 = scmp.ne.s32.totalorder %s141, %s155
      %p157 = scmp.eq.s32.totalorder %s26, 0
      %p158 = por %p156, %p157
      %s160 = sadd.s32 %s159, 1
      %p163 = scmp.eq.s32.totalorder %s20, 1
      %p164 = scmp.ne.s32.totalorder %s159, %s161
      %p165 = scmp.eq.s32.totalorder %s20, 0
      %p166 = por %p164, %p165
      %p167 = scmp.ne.s32.totalorder %s159, %s161
      %p168 = scmp.eq.s32.totalorder %s25, 1
      %p169 = por %p167, %p168
      %p170 = scmp.ne.s32.totalorder %s161, %s162
      %p171 = scmp.eq.s32.totalorder %s25, 0
      %p172 = por %p170, %p171
      %p173 = scmp.ne.s32.totalorder %s161, %s162
      %p174 = scmp.eq.s32.totalorder %s26, 1
      %p175 = por %p173, %p174
      %p177 = scmp.ne.s32.totalorder %s162, %s176
      %p178 = scmp.eq.s32.totalorder %s26, 0
      %p179 = por %p177, %p178
      %s181 = sadd.s32 %s180, 1
      %p184 = scmp.eq.s32.totalorder %s20, 1
      %p185 = scmp.ne.s32.totalorder %s180, %s182
      %p186 = scmp.eq.s32.totalorder %s20, 0
      %p187 = por %p185, %p186
      %p188 = scmp.ne.s32.totalorder %s180, %s182
      %p189 = scmp.eq.s32.totalorder %s25, 1
      %p190 = por %p188, %p189
      %p191 = scmp.ne.s32.totalorder %s182, %s183
      %p192 = scmp.eq.s32.totalorder %s25, 0
      %p193 = por %p191, %p192
      %p194 = scmp.ne.s32.totalorder %s182, %s183
      %p195 = scmp.eq.s32.totalorder %s26, 1
      %p196 = por %p194, %p195
      %p198 = scmp.ne.s32.totalorder %s183, %s197
      %p199 = scmp.eq.s32.totalorder %s26, 0
      %p200 = por %p198, %p199
      %s202 = sadd.s32 %s201, 1
      %p205 = scmp.eq.s32.totalorder %s20, 1
      %p206 = scmp.ne.s32.totalorder %s201, %s203
      %p207 = scmp.eq.s32.totalorder %s20, 0
      %p208 = por %p206, %p207
      %p209 = scmp.ne.s32.totalorder %s201, %s203
      %p210 = scmp.eq.s32.totalorder %s25, 1
      %p211 = por %p209, %p210
      %p212 = scmp.ne.s32.totalorder %s203, %s204
      %p213 = scmp.eq.s32.totalorder %s25, 0
      %p214 = por %p212, %p213
      %p215 = scmp.ne.s32.totalorder %s203, %s204
      %p216 = scmp.eq.s32.totalorder %s26, 1
      %p217 = por %p215, %p216
      %p219 = scmp.ne.s32.totalorder %s204, %s218
      %p220 = scmp.eq.s32.totalorder %s26, 0
      %p221 = por %p219, %p220
      %s222 = ssub.s32 %s20, %s27
      %p223 = scmp.eq.s32.totalorder %s222, 0
      %s225 = sadd.s32 %s224, 1
      %s226 = scalar_select %p223, %s224, %s225
      %p229 = pneg %p223
      %p230 = scmp.eq.s32.totalorder %s20, 1
      %p231 = por %p229, %p230
      %p232 = scmp.ne.s32.totalorder %s224, %s227
      %p233 = scmp.eq.s32.totalorder %s20, 0
      %p234 = por %p232, %p233
      %p235 = scmp.ne.s32.totalorder %s224, %s227
      %p236 = scmp.eq.s32.totalorder %s25, 1
      %p237 = por %p235, %p236
      %p238 = scmp.ne.s32.totalorder %s227, %s228
      %p239 = scmp.eq.s32.totalorder %s25, 0
      %p240 = por %p238, %p239
      %p241 = scmp.ne.s32.totalorder %s227, %s228
      %p242 = scmp.eq.s32.totalorder %s26, 1
      %p243 = por %p241, %p242
      %p245 = scmp.ne.s32.totalorder %s228, %s244
      %p246 = scmp.eq.s32.totalorder %s26, 0
      %p247 = por %p245, %p246
      %p248 = scmp.le.s32.totalorder 1, %s20
      %p249 = scmp.lt.s32.totalorder %s20, 3
      %p250 = pnand %p248, %p249
      %p251 = pneg %p250
      // Predicated region
      $region9: #{tpu_custom_call.1} parent=5 // pred_check
        _
      $region10: #{tpu_custom_call.1} parent=5 // pred_check_branch
        %253 = sbr.rel (%p250) target = $region12
      $region11: #{tpu_custom_call.1} parent=5 // pred_region
        %s254 = ssub.s32 %s20, 1
        // Predicated region
        $region13: #{tpu_custom_call.1} parent=11 // pred_check
          %p255 = pneg %p67
        $region14: #{tpu_custom_call.1} parent=11 // pred_check_branch
          %257 = sbr.rel (%p255) target = $region16
        $region15: #{tpu_custom_call.1} parent=11 // pred_region
          _
        $region16: #{tpu_custom_call.1} parent=11 // pred_fallthru
          _
        // Predicated region
        $region17: #{tpu_custom_call.1} parent=11 // pred_check
          %p258 = pneg %p88
        $region18: #{tpu_custom_call.1} parent=11 // pred_check_branch
          %260 = sbr.rel (%p258) target = $region20
        $region19: #{tpu_custom_call.1} parent=11 // pred_region
          _
        $region20: #{tpu_custom_call.1} parent=11 // pred_fallthru
          _
        // Predicated region
        $region21: #{tpu_custom_call.1} parent=11 // pred_check
          %p261 = pneg %p109
        $region22: #{tpu_custom_call.1} parent=11 // pred_check_branch
          %263 = sbr.rel (%p261) target = $region24
        $region23: #{tpu_custom_call.1} parent=11 // pred_region
          %s265 = ssub.s32 1024, 1024
          %266 = vsyncadd [#allocation3], %s265
          %s267 = sshll.u32 [#allocation2], 4
          %s268 = int_to_ptr.vmem [resolvable:$true] %s267
          %273 = dma.hbm_to_vmem [thread:$0]  %s3, 1024, %s268, [#allocation3], 64, 64, 4
        $region24: #{tpu_custom_call.1} parent=11 // pred_fallthru
          _
        // Predicated region
        $region25: #{tpu_custom_call.1} parent=11 // pred_check
          %p274 = pneg %p130
        $region26: #{tpu_custom_call.1} parent=11 // pred_check_branch
          %276 = sbr.rel (%p274) target = $region28
        $region27: #{tpu_custom_call.1} parent=11 // pred_region
          _
        $region28: #{tpu_custom_call.1} parent=11 // pred_fallthru
          _
        // Predicated region
        $region29: #{tpu_custom_call.1} parent=11 // pred_check
          %p277 = pneg %p151
        $region30: #{tpu_custom_call.1} parent=11 // pred_check_branch
          %279 = sbr.rel (%p277) target = $region32
        $region31: #{tpu_custom_call.1} parent=11 // pred_region
          %s281 = ssub.s32 1024, 1024
          %282 = vsyncadd [#allocation6], %s281
          %s283 = sshll.u32 [#allocation5], 4
          %s284 = int_to_ptr.vmem [resolvable:$true] %s283
          %289 = dma.hbm_to_vmem [thread:$0]  %s5, 1024, %s284, [#allocation6], 64, 64, 4
        $region32: #{tpu_custom_call.1} parent=11 // pred_fallthru
          _
        // Predicated region
        $region33: #{tpu_custom_call.1} parent=11 // pred_check
          %p290 = pneg %p172
        $region34: #{tpu_custom_call.1} parent=11 // pred_check_branch
          %292 = sbr.rel (%p290) target = $region36
        $region35: #{tpu_custom_call.1} parent=11 // pred_region
          _
        $region36: #{tpu_custom_call.1} parent=11 // pred_fallthru
          _
        // Predicated region
        $region37: #{tpu_custom_call.1} parent=11 // pred_check
          %p293 = pneg %p193
        $region38: #{tpu_custom_call.1} parent=11 // pred_check_branch
          %295 = sbr.rel (%p293) target = $region40
        $region39: #{tpu_custom_call.1} parent=11 // pred_region
          %s297 = ssub.s32 1024, 1024
          %298 = vsyncadd [#allocation6], %s297
          %s299 = sshll.u32 [#allocation7], 4
          %s300 = int_to_ptr.vmem [resolvable:$true] %s299
          %305 = dma.hbm_to_vmem [thread:$0]  %s7, 1024, %s300, [#allocation6], 64, 64, 4
        $region40: #{tpu_custom_call.1} parent=11 // pred_fallthru
          _
        // Predicated region
        $region41: #{tpu_custom_call.1} parent=11 // pred_check
          %p306 = pneg %p214
        $region42: #{tpu_custom_call.1} parent=11 // pred_check_branch
          %308 = sbr.rel (%p306) target = $region44
        $region43: #{tpu_custom_call.1} parent=11 // pred_region
          _
        $region44: #{tpu_custom_call.1} parent=11 // pred_fallthru
          _
      $region12: #{tpu_custom_call.1} parent=5 // pred_fallthru
        _
      %p309 = scmp.lt.s32.totalorder %s20, 2
      // Predicated region
      $region45: #{tpu_custom_call.1} parent=5 // pred_check
        %p310 = pneg %p309
      $region46: #{tpu_custom_call.1} parent=5 // pred_check_branch
        %312 = sbr.rel (%p310) target = $region48
      $region47: #{tpu_custom_call.1} parent=5 // pred_region
        // Predicated region
        $region49: #{tpu_custom_call.1} parent=47 // pred_check
          %p313 = pneg %p40
        $region50: #{tpu_custom_call.1} parent=47 // pred_check_branch
          %315 = sbr.rel (%p313) target = $region52
        $region51: #{tpu_custom_call.1} parent=47 // pred_region
          %s316 = smul.u32 4, %s20
          %p317 = scmp.lt.s32.totalorder %s316, 7
          %s318 = scalar_select %p317, %s316, 7
          %s319 = smul.addr %s318, 4
          %s320 = scalar_lea.vmem %s0, %s319
          %s321 = smul.u32 4, %s20
        $region52: #{tpu_custom_call.1} parent=47 // pred_fallthru
          _
      $region48: #{tpu_custom_call.1} parent=5 // pred_fallthru
        _
      %p322 = scmp.le.s32.totalorder 1, %s20
      %p323 = scmp.lt.s32.totalorder %s20, 3
      %p324 = pnand %p322, %p323
      %p325 = pneg %p324
      // Predicated region
      $region53: #{tpu_custom_call.1} parent=5 // pred_check
        _
      $region54: #{tpu_custom_call.1} parent=5 // pred_check_branch
        %327 = sbr.rel (%p324) target = $region56
      $region55: #{tpu_custom_call.1} parent=5 // pred_region
        %s328 = ssub.s32 %s20, 1
        // Predicated region
        $region57: #{tpu_custom_call.1} parent=55 // pred_check
          %p329 = pneg %p109
        $region58: #{tpu_custom_call.1} parent=55 // pred_check_branch
          %331 = sbr.rel (%p329) target = $region60
        $region59: #{tpu_custom_call.1} parent=55 // pred_region
          %332 = dma.done [#allocation3], 1024
        $region60: #{tpu_custom_call.1} parent=55 // pred_fallthru
          _
        // Predicated region
        $region61: #{tpu_custom_call.1} parent=55 // pred_check
          %p333 = pneg %p151
        $region62: #{tpu_custom_call.1} parent=55 // pred_check_branch
          %335 = sbr.rel (%p333) target = $region64
        $region63: #{tpu_custom_call.1} parent=55 // pred_region
          %336 = dma.done [#allocation6], 1024
        $region64: #{tpu_custom_call.1} parent=55 // pred_fallthru
          _
        // Predicated region
        $region65: #{tpu_custom_call.1} parent=55 // pred_check
          %p337 = pneg %p193
        $region66: #{tpu_custom_call.1} parent=55 // pred_check_branch
          %339 = sbr.rel (%p337) target = $region68
        $region67: #{tpu_custom_call.1} parent=55 // pred_region
          %340 = dma.done [#allocation6], 1024
        $region68: #{tpu_custom_call.1} parent=55 // pred_fallthru
          _
        %s341 = smul.u32 4, %s25
        %p342 = scmp.lt.s32.totalorder %s341, 7
        %s343 = scalar_select %p342, %s341, 7
        %s344 = smul.addr %s343, 4
        %s345 = scalar_lea.vmem %s0, %s344
        %p346 = pneg %p46
        %p347 = pneg %p43
        %p348 = pneg %p67
        %p349 = pneg %p64
        %p350 = pneg %p88
        %p351 = pneg %p85
        %p352 = pneg %p109
        %p353 = pneg %p106
        %p354 = pneg %p130
        %p355 = pneg %p127
        %p356 = pneg %p151
        %p357 = pneg %p148
        %p358 = pneg %p172
        %p359 = pneg %p169
        %p360 = pneg %p193
        %p361 = pneg %p190
        %p362 = pneg %p214
        %p363 = pneg %p211
        %p364 = pneg %p240
        %p365 = pneg %p237
        %s366 = sand.u32 %s227, 1
        %s367 = scalar_lea.sflag [#allocation4], %s366
        %s368 = sand.u32 %s227, 1
        %s369 = smul.addr %s368, 16
        %s370 = scalar_lea.vmem [#allocation8], %s369
        %s371 = smul.u32 4, %s25
        %p372 = scmp.lt.s32.totalorder %s371, 7
        %s373 = scalar_select %p372, %s371, 7
        %s374 = smul.addr %s373, 4
        %s375 = scalar_lea.vmem %s0, %s374
        %s376 = smul.u32 4, %s25
        %s377 = smul.u32 4, %s25
        %v379 = vld [vmem:[%s375] sm:$0xf]
        %v380 = vld [vmem:[%s375 + $0x4] sm:$0xf]
        %v381 = vld [vmem:[%s375 + $0x8] sm:$0xf]
        %v382 = vld [vmem:[%s375 + $0xc] sm:$0xf]
        %v383 = vld [vmem:[%s1] sm:$0xf]
        %v384 = vld [vmem:[%s1 + $0x4] sm:$0xf]
        %v385 = vld [vmem:[%s1 + $0x8] sm:$0xf]
        %v386 = vld [vmem:[%s1 + $0xc] sm:$0xf]
        %v387 = vld [vmem:[%s2] sm:$0x1]
        %v389 = vlaneseq
        %v390 = vshrl.u32 %v389, 7
        %v391 = vsub.s32 0, %v390
        %v392 = vrot.slane %v387, %v391
        %v398 = vunpack.c.l.b16 %v379
        %v399 = vunpack.c.l.b16 %v380
        %v400 = vunpack.c.l.b16 %v381
        %v401 = vunpack.c.l.b16 %v382
        %v402 = vpack.c.b16 %v399, %v398
        %v403 = vpack.c.b16 %v401, %v400
        %v408 = vunpack.c.l.b16 %v383
        %v409 = vunpack.c.l.b16 %v384
        %v410 = vunpack.c.l.b16 %v385
        %v411 = vunpack.c.l.b16 %v386
        %v412 = vpack.c.b16 %v409, %v408
        %v413 = vpack.c.b16 %v411, %v410
        %vm416 = vcmask 261120
        %v418 = vsel %vm416, %v402, 0
        %v421 = vsel %vm416, %v403, 0
        %423 = vmatprep.subr.bf16.mxu0 0
        %424 = vmatpush1.bf16.msra.mxu0 0
        %425 = vmatprep.subr.bf16.mxu0 0
        %426 = vmatpush1.bf16.msra.mxu0 0
        %427 = vmatprep.subr.bf16.mxu0 0
        %428 = vmatpush1.bf16.msra.mxu0 0
        %429 = vmatprep.subr.bf16.mxu0 0
        %430 = vmatpush1.bf16.msra.mxu0 0
        %431 = vmatprep.subr.bf16.mxu0 0
        %432 = vmatpush1.bf16.msra.mxu0 0
        %433 = vmatprep.subr.bf16.mxu0 0
        %434 = vmatpush1.bf16.msra.mxu0 0
        %435 = vmatprep.subr.bf16.mxu0 0
        %436 = vmatpush1.bf16.msra.mxu0 %v413
        %437 = vmatprep.subr.bf16.mxu0 0
        %438 = vmatpush1.bf16.msra.mxu0 %v412
        %439 = vmatprep.subr.bf16.mxu0 0
        %440 = vmatpush2.bf16.msra.mxu0 0
        %441 = vmatprep.subr.bf16.mxu0 0
        %442 = vmatpush2.bf16.msra.mxu0 0
        %443 = vmatprep.subr.bf16.mxu0 0
        %444 = vmatpush2.bf16.msra.mxu0 0
        %445 = vmatprep.subr.bf16.mxu0 0
        %446 = vmatpush2.bf16.msra.mxu0 0
        %447 = vmatprep.subr.bf16.mxu0 0
        %448 = vmatpush2.bf16.msra.mxu0 0
        %449 = vmatprep.subr.bf16.mxu0 0
        %450 = vmatpush2.bf16.msra.mxu0 0
        %451 = vmatprep.subr.bf16.mxu0 0
        %452 = vmatpush2.bf16.msra.mxu0 0
        %453 = vmatprep.subr.bf16.mxu0 0
        %454 = vmatpush2.bf16.msra.mxu0 0
        %455 = vmatprep.mubr.bf16.mxu0 0
        %456 = vmatmul.mubr.bf16.gmra.mxu0 %v418
        %v457 = vpop.f32.mrf.mxu0
        %v458 = vadd.f32 %v392, %v457
        %v459 = vpop.f32.mrf.mxu0
        %v460 = vpop.f32.mrf.mxu0
        %v461 = vadd.f32 %v392, %v460
        %v462 = vpop.f32.mrf.mxu0
        %463 = vmatprep.mubr.bf16.mxu0 0
        %464 = vmatmul.mubr.bf16.gmra.mxu0 %v421
        %v465 = vpop.f32.mrf.mxu0
        %v466 = vadd.f32 %v392, %v465
        %v467 = vpop.f32.mrf.mxu0
        %v468 = vpop.f32.mrf.mxu0
        %v469 = vadd.f32 %v392, %v468
        %v470 = vpop.f32.mrf.mxu0
        %471 = vdwg.mxu0
        %v472 = vmax.f32 %v458, 0.0
        %v473 = vmax.f32 %v461, 0.0
        %v474 = vmax.f32 %v466, 0.0
        %v475 = vmax.f32 %v469, 0.0
        %v476 = vpack.c.bf16 %v473, %v472
        %v477 = vpack.c.bf16 %v475, %v474
        %v478 = vld [vmem:[#allocation2] sm:$0xf]
        %v479 = vld [vmem:[#allocation2 + $0x4] sm:$0xf]
        %v480 = vld [vmem:[#allocation2 + $0x8] sm:$0xf]
        %v481 = vld [vmem:[#allocation2 + $0xc] sm:$0xf]
        %v482 = vld [vmem:[#allocation2 + $0x10] sm:$0xf]
        %v483 = vld [vmem:[#allocation2 + $0x14] sm:$0xf]
        %v484 = vld [vmem:[#allocation2 + $0x18] sm:$0xf]
        %v485 = vld [vmem:[#allocation2 + $0x1c] sm:$0xf]
        %v486 = vld [vmem:[#allocation2 + $0x20] sm:$0xf]
        %v487 = vld [vmem:[#allocation2 + $0x24] sm:$0xf]
        %v488 = vld [vmem:[#allocation2 + $0x28] sm:$0xf]
        %v489 = vld [vmem:[#allocation2 + $0x2c] sm:$0xf]
        %v490 = vld [vmem:[#allocation2 + $0x30] sm:$0xf]
        %v491 = vld [vmem:[#allocation2 + $0x34] sm:$0xf]
        %v492 = vld [vmem:[#allocation2 + $0x38] sm:$0xf]
        %v493 = vld [vmem:[#allocation2 + $0x3c] sm:$0xf]
        %v494 = vld [vmem:[%s4] sm:$0x1]
        %v496 = vlaneseq
        %v497 = vshrl.u32 %v496, 7
        %v498 = vsub.s32 0, %v497
        %v499 = vrot.slane %v494, %v498
        %v517 = vunpack.c.l.b16 %v478
        %v518 = vunpack.c.l.b16 %v479
        %v519 = vunpack.c.l.b16 %v480
        %v520 = vunpack.c.l.b16 %v481
        %v521 = vunpack.c.l.b16 %v482
        %v522 = vunpack.c.l.b16 %v483
        %v523 = vunpack.c.l.b16 %v484
        %v524 = vunpack.c.l.b16 %v485
        %v525 = vunpack.c.l.b16 %v486
        %v526 = vunpack.c.l.b16 %v487
        %v527 = vunpack.c.l.b16 %v488
        %v528 = vunpack.c.l.b16 %v489
        %v529 = vunpack.c.l.b16 %v490
        %v530 = vunpack.c.l.b16 %v491
        %v531 = vunpack.c.l.b16 %v492
        %v532 = vunpack.c.l.b16 %v493
        %v533 = vpack.c.b16 %v518, %v517
        %v534 = vpack.c.b16 %v520, %v519
        %v535 = vpack.c.b16 %v522, %v521
        %v536 = vpack.c.b16 %v524, %v523
        %v537 = vpack.c.b16 %v526, %v525
        %v538 = vpack.c.b16 %v528, %v527
        %v539 = vpack.c.b16 %v530, %v529
        %v540 = vpack.c.b16 %v532, %v531
        %549 = vmatprep.subr.bf16.mxu0 0
        %550 = vmatpush1.bf16.msra.mxu0 %v540
        %551 = vmatprep.subr.bf16.mxu0 0
        %552 = vmatpush1.bf16.msra.mxu0 %v539
        %553 = vmatprep.subr.bf16.mxu0 0
        %554 = vmatpush1.bf16.msra.mxu0 %v538
        %555 = vmatprep.subr.bf16.mxu0 0
        %556 = vmatpush1.bf16.msra.mxu0 %v537
        %557 = vmatprep.subr.bf16.mxu0 0
        %558 = vmatpush1.bf16.msra.mxu0 %v536
        %559 = vmatprep.subr.bf16.mxu0 0
        %560 = vmatpush1.bf16.msra.mxu0 %v535
        %561 = vmatprep.subr.bf16.mxu0 0
        %562 = vmatpush1.bf16.msra.mxu0 %v534
        %563 = vmatprep.subr.bf16.mxu0 0
        %564 = vmatpush1.bf16.msra.mxu0 %v533
        %565 = vmatprep.subr.bf16.mxu0 0
        %566 = vmatpush2.bf16.msra.mxu0 0
        %567 = vmatprep.subr.bf16.mxu0 0
        %568 = vmatpush2.bf16.msra.mxu0 0
        %569 = vmatprep.subr.bf16.mxu0 0
        %570 = vmatpush2.bf16.msra.mxu0 0
        %571 = vmatprep.subr.bf16.mxu0 0
        %572 = vmatpush2.bf16.msra.mxu0 0
        %573 = vmatprep.subr.bf16.mxu0 0
        %574 = vmatpush2.bf16.msra.mxu0 0
        %575 = vmatprep.subr.bf16.mxu0 0
        %576 = vmatpush2.bf16.msra.mxu0 0
        %577 = vmatprep.subr.bf16.mxu0 0
        %578 = vmatpush2.bf16.msra.mxu0 0
        %579 = vmatprep.subr.bf16.mxu0 0
        %580 = vmatpush2.bf16.msra.mxu0 0
        %581 = vmatprep.mubr.bf16.mxu0 0
        %582 = vmatmul.mubr.bf16.gmra.mxu0 %v476
        %v583 = vpop.f32.mrf.mxu0
        %v584 = vadd.f32 %v499, %v583
        %v585 = vpop.f32.mrf.mxu0
        %v586 = vpop.f32.mrf.mxu0
        %v587 = vadd.f32 %v499, %v586
        %v588 = vpop.f32.mrf.mxu0
        %589 = vmatprep.mubr.bf16.mxu0 0
        %590 = vmatmul.mubr.bf16.gmra.mxu0 %v477
        %v591 = vpop.f32.mrf.mxu0
        %v592 = vadd.f32 %v499, %v591
        %v593 = vpop.f32.mrf.mxu0
        %v594 = vpop.f32.mrf.mxu0
        %v595 = vadd.f32 %v499, %v594
        %v596 = vpop.f32.mrf.mxu0
        %597 = vdwg.mxu0
        %v598 = vmax.f32 %v584, 0.0
        %v599 = vmax.f32 %v587, 0.0
        %v600 = vmax.f32 %v592, 0.0
        %v601 = vmax.f32 %v595, 0.0
        %v602 = vpack.c.bf16 %v599, %v598
        %v603 = vpack.c.bf16 %v601, %v600
        %v604 = vld [vmem:[#allocation5] sm:$0xf]
        %v605 = vld [vmem:[#allocation5 + $0x4] sm:$0xf]
        %v606 = vld [vmem:[#allocation5 + $0x8] sm:$0xf]
        %v607 = vld [vmem:[#allocation5 + $0xc] sm:$0xf]
        %v608 = vld [vmem:[#allocation5 + $0x10] sm:$0xf]
        %v609 = vld [vmem:[#allocation5 + $0x14] sm:$0xf]
        %v610 = vld [vmem:[#allocation5 + $0x18] sm:$0xf]
        %v611 = vld [vmem:[#allocation5 + $0x1c] sm:$0xf]
        %v612 = vld [vmem:[#allocation5 + $0x20] sm:$0xf]
        %v613 = vld [vmem:[#allocation5 + $0x24] sm:$0xf]
        %v614 = vld [vmem:[#allocation5 + $0x28] sm:$0xf]
        %v615 = vld [vmem:[#allocation5 + $0x2c] sm:$0xf]
        %v616 = vld [vmem:[#allocation5 + $0x30] sm:$0xf]
        %v617 = vld [vmem:[#allocation5 + $0x34] sm:$0xf]
        %v618 = vld [vmem:[#allocation5 + $0x38] sm:$0xf]
        %v619 = vld [vmem:[#allocation5 + $0x3c] sm:$0xf]
        %v620 = vld [vmem:[%s6] sm:$0x1]
        %v622 = vlaneseq
        %v623 = vshrl.u32 %v622, 7
        %v624 = vsub.s32 0, %v623
        %v625 = vrot.slane %v620, %v624
        %v643 = vunpack.c.l.b16 %v604
        %v644 = vunpack.c.l.b16 %v605
        %v645 = vunpack.c.l.b16 %v606
        %v646 = vunpack.c.l.b16 %v607
        %v647 = vunpack.c.l.b16 %v608
        %v648 = vunpack.c.l.b16 %v609
        %v649 = vunpack.c.l.b16 %v610
        %v650 = vunpack.c.l.b16 %v611
        %v651 = vunpack.c.l.b16 %v612
        %v652 = vunpack.c.l.b16 %v613
        %v653 = vunpack.c.l.b16 %v614
        %v654 = vunpack.c.l.b16 %v615
        %v655 = vunpack.c.l.b16 %v616
        %v656 = vunpack.c.l.b16 %v617
        %v657 = vunpack.c.l.b16 %v618
        %v658 = vunpack.c.l.b16 %v619
        %v659 = vpack.c.b16 %v644, %v643
        %v660 = vpack.c.b16 %v646, %v645
        %v661 = vpack.c.b16 %v648, %v647
        %v662 = vpack.c.b16 %v650, %v649
        %v663 = vpack.c.b16 %v652, %v651
        %v664 = vpack.c.b16 %v654, %v653
        %v665 = vpack.c.b16 %v656, %v655
        %v666 = vpack.c.b16 %v658, %v657
        %675 = vmatprep.subr.bf16.mxu0 0
        %676 = vmatpush1.bf16.msra.mxu0 %v666
        %677 = vmatprep.subr.bf16.mxu0 0
        %678 = vmatpush1.bf16.msra.mxu0 %v665
        %679 = vmatprep.subr.bf16.mxu0 0
        %680 = vmatpush1.bf16.msra.mxu0 %v664
        %681 = vmatprep.subr.bf16.mxu0 0
        %682 = vmatpush1.bf16.msra.mxu0 %v663
        %683 = vmatprep.subr.bf16.mxu0 0
        %684 = vmatpush1.bf16.msra.mxu0 %v662
        %685 = vmatprep.subr.bf16.mxu0 0
        %686 = vmatpush1.bf16.msra.mxu0 %v661
        %687 = vmatprep.subr.bf16.mxu0 0
        %688 = vmatpush1.bf16.msra.mxu0 %v660
        %689 = vmatprep.subr.bf16.mxu0 0
        %690 = vmatpush1.bf16.msra.mxu0 %v659
        %691 = vmatprep.subr.bf16.mxu0 0
        %692 = vmatpush2.bf16.msra.mxu0 0
        %693 = vmatprep.subr.bf16.mxu0 0
        %694 = vmatpush2.bf16.msra.mxu0 0
        %695 = vmatprep.subr.bf16.mxu0 0
        %696 = vmatpush2.bf16.msra.mxu0 0
        %697 = vmatprep.subr.bf16.mxu0 0
        %698 = vmatpush2.bf16.msra.mxu0 0
        %699 = vmatprep.subr.bf16.mxu0 0
        %700 = vmatpush2.bf16.msra.mxu0 0
        %701 = vmatprep.subr.bf16.mxu0 0
        %702 = vmatpush2.bf16.msra.mxu0 0
        %703 = vmatprep.subr.bf16.mxu0 0
        %704 = vmatpush2.bf16.msra.mxu0 0
        %705 = vmatprep.subr.bf16.mxu0 0
        %706 = vmatpush2.bf16.msra.mxu0 0
        %707 = vmatprep.mubr.bf16.mxu0 0
        %708 = vmatmul.mubr.bf16.gmra.mxu0 %v602
        %v709 = vpop.f32.mrf.mxu0
        %v710 = vadd.f32 %v625, %v709
        %v711 = vpop.f32.mrf.mxu0
        %v712 = vpop.f32.mrf.mxu0
        %v713 = vadd.f32 %v625, %v712
        %v714 = vpop.f32.mrf.mxu0
        %715 = vmatprep.mubr.bf16.mxu0 0
        %716 = vmatmul.mubr.bf16.gmra.mxu0 %v603
        %v717 = vpop.f32.mrf.mxu0
        %v718 = vadd.f32 %v625, %v717
        %v719 = vpop.f32.mrf.mxu0
        %v720 = vpop.f32.mrf.mxu0
        %v721 = vadd.f32 %v625, %v720
        %v722 = vpop.f32.mrf.mxu0
        %723 = vdwg.mxu0
        %v724 = vmax.f32 %v710, 0.0
        %v725 = vmax.f32 %v713, 0.0
        %v726 = vmax.f32 %v718, 0.0
        %v727 = vmax.f32 %v721, 0.0
        %v728 = vpack.c.bf16 %v725, %v724
        %v729 = vpack.c.bf16 %v727, %v726
        %v730 = vld [vmem:[#allocation7] sm:$0xf]
        %v731 = vld [vmem:[#allocation7 + $0x4] sm:$0xf]
        %v732 = vld [vmem:[#allocation7 + $0x8] sm:$0xf]
        %v733 = vld [vmem:[#allocation7 + $0xc] sm:$0xf]
        %v734 = vld [vmem:[#allocation7 + $0x10] sm:$0xf]
        %v735 = vld [vmem:[#allocation7 + $0x14] sm:$0xf]
        %v736 = vld [vmem:[#allocation7 + $0x18] sm:$0xf]
        %v737 = vld [vmem:[#allocation7 + $0x1c] sm:$0xf]
        %v738 = vld [vmem:[#allocation7 + $0x20] sm:$0xf]
        %v739 = vld [vmem:[#allocation7 + $0x24] sm:$0xf]
        %v740 = vld [vmem:[#allocation7 + $0x28] sm:$0xf]
        %v741 = vld [vmem:[#allocation7 + $0x2c] sm:$0xf]
        %v742 = vld [vmem:[#allocation7 + $0x30] sm:$0xf]
        %v743 = vld [vmem:[#allocation7 + $0x34] sm:$0xf]
        %v744 = vld [vmem:[#allocation7 + $0x38] sm:$0xf]
        %v745 = vld [vmem:[#allocation7 + $0x3c] sm:$0xf]
        %v746 = vld [vmem:[%s8] sm:$0x1]
        %v748 = vlaneseq
        %v749 = vshrl.u32 %v748, 7
        %v750 = vsub.s32 0, %v749
        %v751 = vrot.slane %v746, %v750
        %v769 = vunpack.c.l.b16 %v730
        %v770 = vunpack.c.l.b16 %v731
        %v771 = vunpack.c.l.b16 %v732
        %v772 = vunpack.c.l.b16 %v733
        %v773 = vunpack.c.l.b16 %v734
        %v774 = vunpack.c.l.b16 %v735
        %v775 = vunpack.c.l.b16 %v736
        %v776 = vunpack.c.l.b16 %v737
        %v777 = vunpack.c.l.b16 %v738
        %v778 = vunpack.c.l.b16 %v739
        %v779 = vunpack.c.l.b16 %v740
        %v780 = vunpack.c.l.b16 %v741
        %v781 = vunpack.c.l.b16 %v742
        %v782 = vunpack.c.l.b16 %v743
        %v783 = vunpack.c.l.b16 %v744
        %v784 = vunpack.c.l.b16 %v745
        %v785 = vpack.c.b16 %v770, %v769
        %v786 = vpack.c.b16 %v772, %v771
        %v787 = vpack.c.b16 %v774, %v773
        %v788 = vpack.c.b16 %v776, %v775
        %v789 = vpack.c.b16 %v778, %v777
        %v790 = vpack.c.b16 %v780, %v779
        %v791 = vpack.c.b16 %v782, %v781
        %v792 = vpack.c.b16 %v784, %v783
        %801 = vmatprep.subr.bf16.mxu0 0
        %802 = vmatpush1.bf16.msra.mxu0 %v792
        %803 = vmatprep.subr.bf16.mxu0 0
        %804 = vmatpush1.bf16.msra.mxu0 %v791
        %805 = vmatprep.subr.bf16.mxu0 0
        %806 = vmatpush1.bf16.msra.mxu0 %v790
        %807 = vmatprep.subr.bf16.mxu0 0
        %808 = vmatpush1.bf16.msra.mxu0 %v789
        %809 = vmatprep.subr.bf16.mxu0 0
        %810 = vmatpush1.bf16.msra.mxu0 %v788
        %811 = vmatprep.subr.bf16.mxu0 0
        %812 = vmatpush1.bf16.msra.mxu0 %v787
        %813 = vmatprep.subr.bf16.mxu0 0
        %814 = vmatpush1.bf16.msra.mxu0 %v786
        %815 = vmatprep.subr.bf16.mxu0 0
        %816 = vmatpush1.bf16.msra.mxu0 %v785
        %817 = vmatprep.subr.bf16.mxu0 0
        %818 = vmatpush2.bf16.msra.mxu0 0
        %819 = vmatprep.subr.bf16.mxu0 0
        %820 = vmatpush2.bf16.msra.mxu0 0
        %821 = vmatprep.subr.bf16.mxu0 0
        %822 = vmatpush2.bf16.msra.mxu0 0
        %823 = vmatprep.subr.bf16.mxu0 0
        %824 = vmatpush2.bf16.msra.mxu0 0
        %825 = vmatprep.subr.bf16.mxu0 0
        %826 = vmatpush2.bf16.msra.mxu0 0
        %827 = vmatprep.subr.bf16.mxu0 0
        %828 = vmatpush2.bf16.msra.mxu0 0
        %829 = vmatprep.subr.bf16.mxu0 0
        %830 = vmatpush2.bf16.msra.mxu0 0
        %831 = vmatprep.subr.bf16.mxu0 0
        %832 = vmatpush2.bf16.msra.mxu0 0
        %833 = vmatprep.mubr.bf16.mxu0 0
        %834 = vmatmul.mubr.bf16.gmra.mxu0 %v728
        %v835 = vpop.f32.mrf.mxu0
        %v836 = vadd.f32 %v751, %v835
        %v837 = vpop.f32.mrf.mxu0
        %v838 = vpop.f32.mrf.mxu0
        %v839 = vadd.f32 %v751, %v838
        %v840 = vpop.f32.mrf.mxu0
        %841 = vmatprep.mubr.bf16.mxu0 0
        %842 = vmatmul.mubr.bf16.gmra.mxu0 %v729
        %v843 = vpop.f32.mrf.mxu0
        %v844 = vadd.f32 %v751, %v843
        %v845 = vpop.f32.mrf.mxu0
        %v846 = vpop.f32.mrf.mxu0
        %v847 = vadd.f32 %v751, %v846
        %v848 = vpop.f32.mrf.mxu0
        %849 = vdwg.mxu0
        %v850 = vsub.f32 0.0, %v836
        %v851 = vsub.f32 0.0, %v839
        %v852 = vsub.f32 0.0, %v844
        %v853 = vsub.f32 0.0, %v847
        %v854 = vmul.f32 %v850, 1.442695
        %v855 = vpow.pop %v854
        %v856 = vmul.f32 %v851, 1.442695
        %v857 = vpow.pop %v856
        %v858 = vmul.f32 %v852, 1.442695
        %v859 = vpow.pop %v858
        %v860 = vmul.f32 %v853, 1.442695
        %v861 = vpow.pop %v860
        %v862 = vadd.f32 %v855, 1.0
        %v863 = vadd.f32 %v857, 1.0
        %v864 = vadd.f32 %v859, 1.0
        %v865 = vadd.f32 %v861, 1.0
        %v866 = vrcp.pop %v862
        %v867 = vrcp.pop %v863
        %v868 = vrcp.pop %v864
        %v869 = vrcp.pop %v865
        %v870 = vpack.c.bf16 %v867, %v866
        %v871 = vpack.c.bf16 %v869, %v868
        %v874 = vunpack.c.l.b16 %v870
        %v875 = vunpack.c.h.b16 %v870
        %v876 = vunpack.c.l.b16 %v871
        %v877 = vunpack.c.h.b16 %v871
        %v878 = vpack.c.b16 %v874, %v874
        %v879 = vpack.c.b16 %v875, %v875
        %v880 = vpack.c.b16 %v876, %v876
        %v881 = vpack.c.b16 %v877, %v877
        %886 = vst [vmem:[%s370] sm:$0xf] %v878
        %887 = vst [vmem:[%s370 + $0x4] sm:$0xf] %v879
        %888 = vst [vmem:[%s370 + $0x8] sm:$0xf] %v880
        %889 = vst [vmem:[%s370 + $0xc] sm:$0xf] %v881
        %s890 = sand.u32 %s227, 1
        %s891 = scalar_lea.sflag [#allocation4], %s890
        %s892 = sand.u32 %s227, 1
        %s893 = smul.addr %s892, 16
        %s894 = scalar_lea.vmem [#allocation8], %s893
        // Predicated region
        $region69: #{tpu_custom_call.1} parent=55 // pred_check
          %p895 = pneg %p237
        $region70: #{tpu_custom_call.1} parent=55 // pred_check_branch
          %897 = sbr.rel (%p895) target = $region72
        $region71: #{tpu_custom_call.1} parent=55 // pred_region
          %s898 = smul.u32 4, %s25
          %s900 = ssub.s32 256, 256
          %901 = vsyncadd %s891, %s900
          %s902 = smul.addr %s898, 64
          %s903 = scalar_lea.hbm %s9, %s902
          %s904 = sshll.u32 %s894, 4
          %s905 = int_to_ptr.vmem [resolvable:$true] %s904
          %910 = dma.vmem_to_hbm [thread:$0]  %s905, 256, %s903, %s891, 64, 64, 4
        $region72: #{tpu_custom_call.1} parent=55 // pred_fallthru
          _
      $region56: #{tpu_custom_call.1} parent=5 // pred_fallthru
        _
      %p911 = scmp.le.s32.totalorder 2, %s20
      // Predicated region
      $region73: #{tpu_custom_call.1} parent=5 // pred_check
        %p912 = pneg %p911
      $region74: #{tpu_custom_call.1} parent=5 // pred_check_branch
        %914 = sbr.rel (%p912) target = $region76
      $region75: #{tpu_custom_call.1} parent=5 // pred_region
        %s915 = ssub.s32 %s20, 2
        // Predicated region
        $region77: #{tpu_custom_call.1} parent=75 // pred_check
          %p916 = pneg %p243
        $region78: #{tpu_custom_call.1} parent=75 // pred_check_branch
          %918 = sbr.rel (%p916) target = $region80
        $region79: #{tpu_custom_call.1} parent=75 // pred_region
          %s919 = sand.u32 %s228, 1
          %s920 = scalar_lea.sflag [#allocation4], %s919
          %s921 = sand.u32 %s228, 1
          %s922 = smul.addr %s921, 16
          %s923 = scalar_lea.vmem [#allocation8], %s922
          %924 = dma.done %s920, 256
        $region80: #{tpu_custom_call.1} parent=75 // pred_fallthru
          _
      $region76: #{tpu_custom_call.1} parent=5 // pred_fallthru
        _
    $region6: #{tpu_custom_call.1} parent=1 // loop_footer
      %s24 = sadd.s32 1, %s20
    $region7: #{tpu_custom_call.1} parent=1 // loop_footer_branch
      %19 = sbr.rel target = $region3
    $region8: #{tpu_custom_call.1} parent=1 // loop_exit
      _
    %925 = vsyncpa [#allocation3], 1
    %s926 = scalar_lea.sflag [#allocation3], 1
    %927 = vsyncpa %s926, 1
    %928 = vsyncpa [#allocation6], 1
    %929 = vsyncpa [#allocation4], 1
    %s930 = scalar_lea.sflag [#allocation4], 1
    %931 = vsyncpa %s930, 1

// kernel: tpu_custom_call.1
$region0: #{tpu_custom_call.1}
  #allocation0 [shape = 'u32[]', space=smem, size = 0x4, offset = 0x4, fixed_abs, tag = 'smem constant byte address 0x4 - core index']
  #allocation1 [shape = 'u32[144,128]{1,0:T(1,128)}', space=vmem, size = 0x12000, scoped, tag = 'internal scratch']
  %s0 = inlined_call_operand.vmem [shape: bf16[64,32], index: 0, kind: input, shape index: {}]
  %s1 = inlined_call_operand.vmem [shape: bf16[32,128], index: 1, kind: input, shape index: {}]
  %s2 = inlined_call_operand.vmem [shape: f32[1,128], index: 2, kind: input, shape index: {}]
  %s3 = inlined_call_operand.hbm [shape: bf16[128,128], index: 3, kind: input, shape index: {}]
  %s4 = inlined_call_operand.vmem [shape: f32[1,128], index: 4, kind: input, shape index: {}]
  %s5 = inlined_call_operand.hbm [shape: bf16[128,128], index: 5, kind: input, shape index: {}]
  %s6 = inlined_call_operand.vmem [shape: f32[1,128], index: 6, kind: input, shape index: {}]
  %s7 = inlined_call_operand.hbm [shape: bf16[128,128], index: 7, kind: input, shape index: {}]
  %s8 = inlined_call_operand.vmem [shape: f32[1,128], index: 8, kind: input, shape index: {}]
  %s9 = inlined_call_operand.hbm [shape: bf16[64,128], index: 9, kind: output, shape index: {}]
  %s10 = sld [smem:[#allocation0]]
  $region81: #{tpu_custom_call.1} parent=0
    _
  %s12 = ssub.s32 1, %s10
  %s13 = scalar_select 0, %s12, %s10
  $region1: #{tpu_custom_call.1} parent=0
    #allocation2 [shape = 'u8[32768]{0}', space=vmem, size = 0x8000, scoped, tag = 'input window, operand 3, single buffered']
    #allocation3 [shape = 's32[2]{0}', space=sflag, size = 0x8, scoped, tag = 'scoped memory for tpu_custom_call.1']
    #allocation4 [shape = 's32[2]{0}', space=sflag, size = 0x8, scoped, tag = 'scoped memory for tpu_custom_call.1']
    #allocation5 [shape = 'u8[32768]{0}', space=vmem, size = 0x8000, scoped, tag = 'input window, operand 5, single buffered']
    #allocation6 [shape = 's32[1]{0}', space=sflag, size = 0x4, scoped, tag = 'scoped memory for tpu_custom_call.1']
    #allocation7 [shape = 'u8[32768]{0}', space=vmem, size = 0x8000, scoped, tag = 'input window, operand 7, single buffered']
    #allocation8 [shape = 'u8[16384]{0}', space=vmem, size = 0x4000, scoped, tag = 'output window, operand 0']
    %14 = vsyncpa [#allocation3], 0
    %15 = vsyncpa [#allocation6], 0
    %16 = vsyncpa [#allocation4], 0
    %s17 = scalar_lea.sflag [#allocation4], 1
    %18 = vsyncpa %s17, 0
    loop: start=0, step=1, limit=4
    $region2: #{tpu_custom_call.1} parent=1 // loop_pre_header
      _
    $region3: #{tpu_custom_call.1} parent=1 // loop_header
      %s20 = sphi 0, %s24
      %p21 = scmp.ge.s32.totalorder %s20, 4
      %s30 = sphi 0, %s32
      %s33 = sphi 0, %s30
      %s34 = sphi 0, %s33
      %s50 = sphi 0, %s34
      %s54 = sphi 0, %s54
      %s56 = sphi 0, %s54
      %s57 = sphi 0, %s56
      %s71 = sphi 0, %s57
      %s75 = sphi 0, %s75
      %s77 = sphi 0, %s75
      %s78 = sphi 0, %s77
      %s92 = sphi 0, %s78
      %s96 = sphi 0, %s96
      %s98 = sphi 0, %s96
      %s99 = sphi 0, %s98
      %s113 = sphi 0, %s99
      %s117 = sphi 0, %s117
      %s119 = sphi 0, %s117
      %s120 = sphi 0, %s119
      %s134 = sphi 0, %s120
      %s138 = sphi 0, %s138
      %s140 = sphi 0, %s138
      %s141 = sphi 0, %s140
      %s155 = sphi 0, %s141
      %s159 = sphi 0, %s159
      %s161 = sphi 0, %s159
      %s162 = sphi 0, %s161
      %s176 = sphi 0, %s162
      %s180 = sphi 0, %s180
      %s182 = sphi 0, %s180
      %s183 = sphi 0, %s182
      %s197 = sphi 0, %s183
      %s201 = sphi 0, %s201
      %s203 = sphi 0, %s201
      %s204 = sphi 0, %s203
      %s218 = sphi 0, %s204
      %s224 = sphi 0, %s226
      %s227 = sphi 0, %s224
      %s228 = sphi 0, %s227
      %s244 = sphi 0, %s228
    $region4: #{tpu_custom_call.1} parent=1 // loop_header_branch
      %23 = sbr.rel (%p21) target = $region8
    $region5: #{tpu_custom_call.1} parent=1 // loop_body
      %s25 = ssub.s32 %s20, 1
      %s26 = ssub.s32 %s20, 2
      %s27 = sadd.s32 %s20, 1
      %s28 = ssub.s32 %s20, %s27
      %p29 = scmp.eq.s32.totalorder %s28, 0
      %s31 = sadd.s32 %s30, 1
      %s32 = scalar_select %p29, %s30, %s31
      %p35 = pneg %p29
      %p36 = scmp.eq.s32.totalorder %s20, 1
      %p37 = por %p35, %p36
      %p38 = scmp.ne.s32.totalorder %s30, %s33
      %p39 = scmp.eq.s32.totalorder %s20, 0
      %p40 = por %p38, %p39
      %p41 = scmp.ne.s32.totalorder %s30, %s33
      %p42 = scmp.eq.s32.totalorder %s25, 1
      %p43 = por %p41, %p42
      %p44 = scmp.ne.s32.totalorder %s33, %s34
      %p45 = scmp.eq.s32.totalorder %s25, 0
      %p46 = por %p44, %p45
      %p47 = scmp.ne.s32.totalorder %s33, %s34
      %p48 = scmp.eq.s32.totalorder %s26, 1
      %p49 = por %p47, %p48
      %p51 = scmp.ne.s32.totalorder %s34, %s50
      %p52 = scmp.eq.s32.totalorder %s26, 0
      %p53 = por %p51, %p52
      %s55 = sadd.s32 %s54, 1
      %p58 = scmp.eq.s32.totalorder %s20, 1
      %p59 = scmp.ne.s32.totalorder %s54, %s56
      %p60 = scmp.eq.s32.totalorder %s20, 0
      %p61 = por %p59, %p60
      %p62 = scmp.ne.s32.totalorder %s54, %s56
      %p63 = scmp.eq.s32.totalorder %s25, 1
      %p64 = por %p62, %p63
      %p65 = scmp.ne.s32.totalorder %s56, %s57
      %p66 = scmp.eq.s32.totalorder %s25, 0
      %p67 = por %p65, %p66
      %p68 = scmp.ne.s32.totalorder %s56, %s57
      %p69 = scmp.eq.s32.totalorder %s26, 1
      %p70 = por %p68, %p69
      %p72 = scmp.ne.s32.totalorder %s57, %s71
      %p73 = scmp.eq.s32.totalorder %s26, 0
      %p74 = por %p72, %p73
      %s76 = sadd.s32 %s75, 1
      %p79 = scmp.eq.s32.totalorder %s20, 1
      %p80 = scmp.ne.s32.totalorder %s75, %s77
      %p81 = scmp.eq.s32.totalorder %s20, 0
      %p82 = por %p80, %p81
      %p83 = scmp.ne.s32.totalorder %s75, %s77
      %p84 = scmp.eq.s32.totalorder %s25, 1
      %p85 = por %p83, %p84
      %p86 = scmp.ne.s32.totalorder %s77, %s78
      %p87 = scmp.eq.s32.totalorder %s25, 0
      %p88 = por %p86, %p87
      %p89 = scmp.ne.s32.totalorder %s77, %s78
      %p90 = scmp.eq.s32.totalorder %s26, 1
      %p91 = por %p89, %p90
      %p93 = scmp.ne.s32.totalorder %s78, %s92
      %p94 = scmp.eq.s32.totalorder %s26, 0
      %p95 = por %p93, %p94
      %s97 = sadd.s32 %s96, 1
      %p100 = scmp.eq.s32.totalorder %s20, 1
      %p101 = scmp.ne.s32.totalorder %s96, %s98
      %p102 = scmp.eq.s32.totalorder %s20, 0
      %p103 = por %p101, %p102
      %p104 = scmp.ne.s32.totalorder %s96, %s98
      %p105 = scmp.eq.s32.totalorder %s25, 1
      %p106 = por %p104, %p105
      %p107 = scmp.ne.s32.totalorder %s98, %s99
      %p108 = scmp.eq.s32.totalorder %s25, 0
      %p109 = por %p107, %p108
      %p110 = scmp.ne.s32.totalorder %s98, %s99
      %p111 = scmp.eq.s32.totalorder %s26, 1
      %p112 = por %p110, %p111
      %p114 = scmp.ne.s32.totalorder %s99, %s113
      %p115 = scmp.eq.s32.totalorder %s26, 0
      %p116 = por %p114, %p115
      %s118 = sadd.s32 %s117, 1
      %p121 = scmp.eq.s32.totalorder %s20, 1
      %p122 = scmp.ne.s32.totalorder %s117, %s119
      %p123 = scmp.eq.s32.totalorder %s20, 0
      %p124 = por %p122, %p123
      %p125 = scmp.ne.s32.totalorder %s117, %s119
      %p126 = scmp.eq.s32.totalorder %s25, 1
      %p127 = por %p125, %p126
      %p128 = scmp.ne.s32.totalorder %s119, %s120
      %p129 = scmp.eq.s32.totalorder %s25, 0
      %p130 = por %p128, %p129
      %p131 = scmp.ne.s32.totalorder %s119, %s120
      %p132 = scmp.eq.s32.totalorder %s26, 1
      %p133 = por %p131, %p132
      %p135 = scmp.ne.s32.totalorder %s120, %s134
      %p136 = scmp.eq.s32.totalorder %s26, 0
      %p137 = por %p135, %p136
      %s139 = sadd.s32 %s138, 1
      %p142 = scmp.eq.s32.totalorder %s20, 1
      %p143 = scmp.ne.s32.totalorder %s138, %s140
      %p144 = scmp.eq.s32.totalorder %s20, 0
      %p145 = por %p143, %p144
      %p146 = scmp.ne.s32.totalorder %s138, %s140
      %p147 = scmp.eq.s32.totalorder %s25, 1
      %p148 = por %p146, %p147
      %p149 = scmp.ne.s32.totalorder %s140, %s141
      %p150 = scmp.eq.s32.totalorder %s25, 0
      %p151 = por %p149, %p150
      %p152 = scmp.ne.s32.totalorder %s140, %s141
      %p153 = scmp.eq.s32.totalorder %s26, 1
      %p154 = por %p152, %p153
      %p156 = scmp.ne.s32.totalorder %s141, %s155
      %p157 = scmp.eq.s32.totalorder %s26, 0
      %p158 = por %p156, %p157
      %s160 = sadd.s32 %s159, 1
      %p163 = scmp.eq.s32.totalorder %s20, 1
      %p164 = scmp.ne.s32.totalorder %s159, %s161
      %p165 = scmp.eq.s32.totalorder %s20, 0
      %p166 = por %p164, %p165
      %p167 = scmp.ne.s32.totalorder %s159, %s161
      %p168 = scmp.eq.s32.totalorder %s25, 1
      %p169 = por %p167, %p168
      %p170 = scmp.ne.s32.totalorder %s161, %s162
      %p171 = scmp.eq.s32.totalorder %s25, 0
      %p172 = por %p170, %p171
      %p173 = scmp.ne.s32.totalorder %s161, %s162
      %p174 = scmp.eq.s32.totalorder %s26, 1
      %p175 = por %p173, %p174
      %p177 = scmp.ne.s32.totalorder %s162, %s176
      %p178 = scmp.eq.s32.totalorder %s26, 0
      %p179 = por %p177, %p178
      %s181 = sadd.s32 %s180, 1
      %p184 = scmp.eq.s32.totalorder %s20, 1
      %p185 = scmp.ne.s32.totalorder %s180, %s182
      %p186 = scmp.eq.s32.totalorder %s20, 0
      %p187 = por %p185, %p186
      %p188 = scmp.ne.s32.totalorder %s180, %s182
      %p189 = scmp.eq.s32.totalorder %s25, 1
      %p190 = por %p188, %p189
      %p191 = scmp.ne.s32.totalorder %s182, %s183
      %p192 = scmp.eq.s32.totalorder %s25, 0
      %p193 = por %p191, %p192
      %p194 = scmp.ne.s32.totalorder %s182, %s183
      %p195 = scmp.eq.s32.totalorder %s26, 1
      %p196 = por %p194, %p195
      %p198 = scmp.ne.s32.totalorder %s183, %s197
      %p199 = scmp.eq.s32.totalorder %s26, 0
      %p200 = por %p198, %p199
      %s202 = sadd.s32 %s201, 1
      %p205 = scmp.eq.s32.totalorder %s20, 1
      %p206 = scmp.ne.s32.totalorder %s201, %s203
      %p207 = scmp.eq.s32.totalorder %s20, 0
      %p208 = por %p206, %p207
      %p209 = scmp.ne.s32.totalorder %s201, %s203
      %p210 = scmp.eq.s32.totalorder %s25, 1
      %p211 = por %p209, %p210
      %p212 = scmp.ne.s32.totalorder %s203, %s204
      %p213 = scmp.eq.s32.totalorder %s25, 0
      %p214 = por %p212, %p213
      %p215 = scmp.ne.s32.totalorder %s203, %s204
      %p216 = scmp.eq.s32.totalorder %s26, 1
      %p217 = por %p215, %p216
      %p219 = scmp.ne.s32.totalorder %s204, %s218
      %p220 = scmp.eq.s32.totalorder %s26, 0
      %p221 = por %p219, %p220
      %s222 = ssub.s32 %s20, %s27
      %p223 = scmp.eq.s32.totalorder %s222, 0
      %s225 = sadd.s32 %s224, 1
      %s226 = scalar_select %p223, %s224, %s225
      %p229 = pneg %p223
      %p230 = scmp.eq.s32.totalorder %s20, 1
      %p231 = por %p229, %p230
      %p232 = scmp.ne.s32.totalorder %s224, %s227
      %p233 = scmp.eq.s32.totalorder %s20, 0
      %p234 = por %p232, %p233
      %p235 = scmp.ne.s32.totalorder %s224, %s227
      %p236 = scmp.eq.s32.totalorder %s25, 1
      %p237 = por %p235, %p236
      %p238 = scmp.ne.s32.totalorder %s227, %s228
      %p239 = scmp.eq.s32.totalorder %s25, 0
      %p240 = por %p238, %p239
      %p241 = scmp.ne.s32.totalorder %s227, %s228
      %p242 = scmp.eq.s32.totalorder %s26, 1
      %p243 = por %p241, %p242
      %p245 = scmp.ne.s32.totalorder %s228, %s244
      %p246 = scmp.eq.s32.totalorder %s26, 0
      %p247 = por %p245, %p246
      %p248 = scmp.le.s32.totalorder 1, %s20
      %p249 = scmp.lt.s32.totalorder %s20, 3
      %p250 = pnand %p248, %p249
      %p251 = pneg %p250
      // Predicated region
      $region9: #{tpu_custom_call.1} parent=5 // pred_check
        _
      $region10: #{tpu_custom_call.1} parent=5 // pred_check_branch
        %253 = sbr.rel (%p250) target = $region12
      $region11: #{tpu_custom_call.1} parent=5 // pred_region
        %s254 = ssub.s32 %s20, 1
        // Predicated region
        $region13: #{tpu_custom_call.1} parent=11 // pred_check
          %p255 = pneg %p67
        $region14: #{tpu_custom_call.1} parent=11 // pred_check_branch
          %257 = sbr.rel (%p255) target = $region16
        $region15: #{tpu_custom_call.1} parent=11 // pred_region
          _
        $region16: #{tpu_custom_call.1} parent=11 // pred_fallthru
          _
        // Predicated region
        $region17: #{tpu_custom_call.1} parent=11 // pred_check
          %p258 = pneg %p88
        $region18: #{tpu_custom_call.1} parent=11 // pred_check_branch
          %260 = sbr.rel (%p258) target = $region20
        $region19: #{tpu_custom_call.1} parent=11 // pred_region
          _
        $region20: #{tpu_custom_call.1} parent=11 // pred_fallthru
          _
        // Predicated region
        $region21: #{tpu_custom_call.1} parent=11 // pred_check
          %p261 = pneg %p109
        $region22: #{tpu_custom_call.1} parent=11 // pred_check_branch
          %263 = sbr.rel (%p261) target = $region24
        $region23: #{tpu_custom_call.1} parent=11 // pred_region
          %s265 = ssub.s32 1024, 1024
          %266 = vsyncadd [#allocation3], %s265
          %s267 = sshll.u32 [#allocation2], 4
          %s268 = int_to_ptr.vmem [resolvable:$true] %s267
          %273 = dma.hbm_to_vmem [thread:$0]  %s3, 1024, %s268, [#allocation3], 64, 64, 4
        $region24: #{tpu_custom_call.1} parent=11 // pred_fallthru
          _
        // Predicated region
        $region25: #{tpu_custom_call.1} parent=11 // pred_check
          %p274 = pneg %p130
        $region26: #{tpu_custom_call.1} parent=11 // pred_check_branch
          %276 = sbr.rel (%p274) target = $region28
        $region27: #{tpu_custom_call.1} parent=11 // pred_region
          _
        $region28: #{tpu_custom_call.1} parent=11 // pred_fallthru
          _
        // Predicated region
        $region29: #{tpu_custom_call.1} parent=11 // pred_check
          %p277 = pneg %p151
        $region30: #{tpu_custom_call.1} parent=11 // pred_check_branch
          %279 = sbr.rel (%p277) target = $region32
        $region31: #{tpu_custom_call.1} parent=11 // pred_region
          %s281 = ssub.s32 1024, 1024
          %282 = vsyncadd [#allocation6], %s281
          %s283 = sshll.u32 [#allocation5], 4
          %s284 = int_to_ptr.vmem [resolvable:$true] %s283
          %289 = dma.hbm_to_vmem [thread:$0]  %s5, 1024, %s284, [#allocation6], 64, 64, 4
        $region32: #{tpu_custom_call.1} parent=11 // pred_fallthru
          _
        // Predicated region
        $region33: #{tpu_custom_call.1} parent=11 // pred_check
          %p290 = pneg %p172
        $region34: #{tpu_custom_call.1} parent=11 // pred_check_branch
          %292 = sbr.rel (%p290) target = $region36
        $region35: #{tpu_custom_call.1} parent=11 // pred_region
          _
        $region36: #{tpu_custom_call.1} parent=11 // pred_fallthru
          _
        // Predicated region
        $region37: #{tpu_custom_call.1} parent=11 // pred_check
          %p293 = pneg %p193
        $region38: #{tpu_custom_call.1} parent=11 // pred_check_branch
          %295 = sbr.rel (%p293) target = $region40
        $region39: #{tpu_custom_call.1} parent=11 // pred_region
          %s297 = ssub.s32 1024, 1024
          %298 = vsyncadd [#allocation6], %s297
          %s299 = sshll.u32 [#allocation7], 4
          %s300 = int_to_ptr.vmem [resolvable:$true] %s299
          %305 = dma.hbm_to_vmem [thread:$0]  %s7, 1024, %s300, [#allocation6], 64, 64, 4
        $region40: #{tpu_custom_call.1} parent=11 // pred_fallthru
          _
        // Predicated region
        $region41: #{tpu_custom_call.1} parent=11 // pred_check
          %p306 = pneg %p214
        $region42: #{tpu_custom_call.1} parent=11 // pred_check_branch
          %308 = sbr.rel (%p306) target = $region44
        $region43: #{tpu_custom_call.1} parent=11 // pred_region
          _
        $region44: #{tpu_custom_call.1} parent=11 // pred_fallthru
          _
      $region12: #{tpu_custom_call.1} parent=5 // pred_fallthru
        _
      %p309 = scmp.lt.s32.totalorder %s20, 2
      // Predicated region
      $region45: #{tpu_custom_call.1} parent=5 // pred_check
        %p310 = pneg %p309
      $region46: #{tpu_custom_call.1} parent=5 // pred_check_branch
        %312 = sbr.rel (%p310) target = $region48
      $region47: #{tpu_custom_call.1} parent=5 // pred_region
        // Predicated region
        $region49: #{tpu_custom_call.1} parent=47 // pred_check
          %p313 = pneg %p40
        $region50: #{tpu_custom_call.1} parent=47 // pred_check_branch
          %315 = sbr.rel (%p313) target = $region52
        $region51: #{tpu_custom_call.1} parent=47 // pred_region
          %s316 = smul.u32 4, %s20
          %p317 = scmp.lt.s32.totalorder %s316, 7
          %s318 = scalar_select %p317, %s316, 7
          %s319 = smul.addr %s318, 4
          %s320 = scalar_lea.vmem %s0, %s319
          %s321 = smul.u32 4, %s20
        $region52: #{tpu_custom_call.1} parent=47 // pred_fallthru
          _
      $region48: #{tpu_custom_call.1} parent=5 // pred_fallthru
        _
      %p322 = scmp.le.s32.totalorder 1, %s20
      %p323 = scmp.lt.s32.totalorder %s20, 3
      %p324 = pnand %p322, %p323
      %p325 = pneg %p324
      // Predicated region
      $region53: #{tpu_custom_call.1} parent=5 // pred_check
        _
      $region54: #{tpu_custom_call.1} parent=5 // pred_check_branch
        %327 = sbr.rel (%p324) target = $region56
      $region55: #{tpu_custom_call.1} parent=5 // pred_region
        %s328 = ssub.s32 %s20, 1
        // Predicated region
        $region57: #{tpu_custom_call.1} parent=55 // pred_check
          %p329 = pneg %p109
        $region58: #{tpu_custom_call.1} parent=55 // pred_check_branch
          %331 = sbr.rel (%p329) target = $region60
        $region59: #{tpu_custom_call.1} parent=55 // pred_region
          %332 = dma.done [#allocation3], 1024
        $region60: #{tpu_custom_call.1} parent=55 // pred_fallthru
          _
        // Predicated region
        $region61: #{tpu_custom_call.1} parent=55 // pred_check
          %p333 = pneg %p151
        $region62: #{tpu_custom_call.1} parent=55 // pred_check_branch
          %335 = sbr.rel (%p333) target = $region64
        $region63: #{tpu_custom_call.1} parent=55 // pred_region
          %336 = dma.done [#allocation6], 1024
        $region64: #{tpu_custom_call.1} parent=55 // pred_fallthru
          _
        // Predicated region
        $region65: #{tpu_custom_call.1} parent=55 // pred_check
          %p337 = pneg %p193
        $region66: #{tpu_custom_call.1} parent=55 // pred_check_branch
          %339 = sbr.rel (%p337) target = $region68
        $region67: #{tpu_custom_call.1} parent=55 // pred_region
          %340 = dma.done [#allocation6], 1024
        $region68: #{tpu_custom_call.1} parent=55 // pred_fallthru
          _
        %s341 = smul.u32 4, %s25
        %p342 = scmp.lt.s32.totalorder %s341, 7
        %s343 = scalar_select %p342, %s341, 7
        %s344 = smul.addr %s343, 4
        %s345 = scalar_lea.vmem %s0, %s344
        %p346 = pneg %p46
        %p347 = pneg %p43
        %p348 = pneg %p67
        %p349 = pneg %p64
        %p350 = pneg %p88
        %p351 = pneg %p85
        %p352 = pneg %p109
        %p353 = pneg %p106
        %p354 = pneg %p130
        %p355 = pneg %p127
        %p356 = pneg %p151
        %p357 = pneg %p148
        %p358 = pneg %p172
        %p359 = pneg %p169
        %p360 = pneg %p193
        %p361 = pneg %p190
        %p362 = pneg %p214
        %p363 = pneg %p211
        %p364 = pneg %p240
        %p365 = pneg %p237
        %s366 = sand.u32 %s227, 1
        %s367 = scalar_lea.sflag [#allocation4], %s366
        %s368 = sand.u32 %s227, 1
        %s369 = smul.addr %s368, 16
        %s370 = scalar_lea.vmem [#allocation8], %s369
        %s371 = smul.u32 4, %s25
        %p372 = scmp.lt.s32.totalorder %s371, 7
        %s373 = scalar_select %p372, %s371, 7
        %s374 = smul.addr %s373, 4
        %s375 = scalar_lea.vmem %s0, %s374
        %s376 = smul.u32 4, %s25
        %s377 = smul.u32 4, %s25
        %v379 = vld [vmem:[%s375] sm:$0xf]
        %v380 = vld [vmem:[%s375 + $0x4] sm:$0xf]
        %v381 = vld [vmem:[%s375 + $0x8] sm:$0xf]
        %v382 = vld [vmem:[%s375 + $0xc] sm:$0xf]
        %v383 = vld [vmem:[%s1] sm:$0xf]
        %v384 = vld [vmem:[%s1 + $0x4] sm:$0xf]
        %v385 = vld [vmem:[%s1 + $0x8] sm:$0xf]
        %v386 = vld [vmem:[%s1 + $0xc] sm:$0xf]
        %v387 = vld [vmem:[%s2] sm:$0x1]
        %v389 = vlaneseq
        %v390 = vshrl.u32 %v389, 7
        %v391 = vsub.s32 0, %v390
        %v392 = vrot.slane %v387, %v391
        %v398 = vunpack.c.l.b16 %v379
        %v399 = vunpack.c.l.b16 %v380
        %v400 = vunpack.c.l.b16 %v381
        %v401 = vunpack.c.l.b16 %v382
        %v402 = vpack.c.b16 %v399, %v398
        %v403 = vpack.c.b16 %v401, %v400
        %v408 = vunpack.c.l.b16 %v383
        %v409 = vunpack.c.l.b16 %v384
        %v410 = vunpack.c.l.b16 %v385
        %v411 = vunpack.c.l.b16 %v386
        %v412 = vpack.c.b16 %v409, %v408
        %v413 = vpack.c.b16 %v411, %v410
        %vm416 = vcmask 261120
        %v418 = vsel %vm416, %v402, 0
        %v421 = vsel %vm416, %v403, 0
        %423 = vmatprep.subr.bf16.mxu0 0
        %424 = vmatpush1.bf16.msra.mxu0 0
        %425 = vmatprep.subr.bf16.mxu0 0
        %426 = vmatpush1.bf16.msra.mxu0 0
        %427 = vmatprep.subr.bf16.mxu0 0
        %428 = vmatpush1.bf16.msra.mxu0 0
        %429 = vmatprep.subr.bf16.mxu0 0
        %430 = vmatpush1.bf16.msra.mxu0 0
        %431 = vmatprep.subr.bf16.mxu0 0
        %432 = vmatpush1.bf16.msra.mxu0 0
        %433 = vmatprep.subr.bf16.mxu0 0
        %434 = vmatpush1.bf16.msra.mxu0 0
        %435 = vmatprep.subr.bf16.mxu0 0
        %436 = vmatpush1.bf16.msra.mxu0 %v413
        %437 = vmatprep.subr.bf16.mxu0 0
        %438 = vmatpush1.bf16.msra.mxu0 %v412
        %439 = vmatprep.subr.bf16.mxu0 0
        %440 = vmatpush2.bf16.msra.mxu0 0
        %441 = vmatprep.subr.bf16.mxu0 0
        %442 = vmatpush2.bf16.msra.mxu0 0
        %443 = vmatprep.subr.bf16.mxu0 0
        %444 = vmatpush2.bf16.msra.mxu0 0
        %445 = vmatprep.subr.bf16.mxu0 0
        %446 = vmatpush2.bf16.msra.mxu0 0
        %447 = vmatprep.subr.bf16.mxu0 0
        %448 = vmatpush2.bf16.msra.mxu0 0
        %449 = vmatprep.subr.bf16.mxu0 0
        %450 = vmatpush2.bf16.msra.mxu0 0
        %451 = vmatprep.subr.bf16.mxu0 0
        %452 = vmatpush2.bf16.msra.mxu0 0
        %453 = vmatprep.subr.bf16.mxu0 0
        %454 = vmatpush2.bf16.msra.mxu0 0
        %455 = vmatprep.mubr.bf16.mxu0 0
        %456 = vmatmul.mubr.bf16.gmra.mxu0 %v418
        %v457 = vpop.f32.mrf.mxu0
        %v458 = vadd.f32 %v392, %v457
        %v459 = vpop.f32.mrf.mxu0
        %v460 = vpop.f32.mrf.mxu0
        %v461 = vadd.f32 %v392, %v460
        %v462 = vpop.f32.mrf.mxu0
        %463 = vmatprep.mubr.bf16.mxu0 0
        %464 = vmatmul.mubr.bf16.gmra.mxu0 %v421
        %v465 = vpop.f32.mrf.mxu0
        %v466 = vadd.f32 %v392, %v465
        %v467 = vpop.f32.mrf.mxu0
        %v468 = vpop.f32.mrf.mxu0
        %v469 = vadd.f32 %v392, %v468
        %v470 = vpop.f32.mrf.mxu0
        %471 = vdwg.mxu0
        %v472 = vmax.f32 %v458, 0.0
        %v473 = vmax.f32 %v461, 0.0
        %v474 = vmax.f32 %v466, 0.0
        %v475 = vmax.f32 %v469, 0.0
        %v476 = vpack.c.bf16 %v473, %v472
        %v477 = vpack.c.bf16 %v475, %v474
        %v478 = vld [vmem:[#allocation2] sm:$0xf]
        %v479 = vld [vmem:[#allocation2 + $0x4] sm:$0xf]
        %v480 = vld [vmem:[#allocation2 + $0x8] sm:$0xf]
        %v481 = vld [vmem:[#allocation2 + $0xc] sm:$0xf]
        %v482 = vld [vmem:[#allocation2 + $0x10] sm:$0xf]
        %v483 = vld [vmem:[#allocation2 + $0x14] sm:$0xf]
        %v484 = vld [vmem:[#allocation2 + $0x18] sm:$0xf]
        %v485 = vld [vmem:[#allocation2 + $0x1c] sm:$0xf]
        %v486 = vld [vmem:[#allocation2 + $0x20] sm:$0xf]
        %v487 = vld [vmem:[#allocation2 + $0x24] sm:$0xf]
        %v488 = vld [vmem:[#allocation2 + $0x28] sm:$0xf]
        %v489 = vld [vmem:[#allocation2 + $0x2c] sm:$0xf]
        %v490 = vld [vmem:[#allocation2 + $0x30] sm:$0xf]
        %v491 = vld [vmem:[#allocation2 + $0x34] sm:$0xf]
        %v492 = vld [vmem:[#allocation2 + $0x38] sm:$0xf]
        %v493 = vld [vmem:[#allocation2 + $0x3c] sm:$0xf]
        %v494 = vld [vmem:[%s4] sm:$0x1]
        %v496 = vlaneseq
        %v497 = vshrl.u32 %v496, 7
        %v498 = vsub.s32 0, %v497
        %v499 = vrot.slane %v494, %v498
        %v517 = vunpack.c.l.b16 %v478
        %v518 = vunpack.c.l.b16 %v479
        %v519 = vunpack.c.l.b16 %v480
        %v520 = vunpack.c.l.b16 %v481
        %v521 = vunpack.c.l.b16 %v482
        %v522 = vunpack.c.l.b16 %v483
        %v523 = vunpack.c.l.b16 %v484
        %v524 = vunpack.c.l.b16 %v485
        %v525 = vunpack.c.l.b16 %v486
        %v526 = vunpack.c.l.b16 %v487
        %v527 = vunpack.c.l.b16 %v488
        %v528 = vunpack.c.l.b16 %v489
        %v529 = vunpack.c.l.b16 %v490
        %v530 = vunpack.c.l.b16 %v491
        %v531 = vunpack.c.l.b16 %v492
        %v532 = vunpack.c.l.b16 %v493
        %v533 = vpack.c.b16 %v518, %v517
        %v534 = vpack.c.b16 %v520, %v519
        %v535 = vpack.c.b16 %v522, %v521
        %v536 = vpack.c.b16 %v524, %v523
        %v537 = vpack.c.b16 %v526, %v525
        %v538 = vpack.c.b16 %v528, %v527
        %v539 = vpack.c.b16 %v530, %v529
        %v540 = vpack.c.b16 %v532, %v531
        %549 = vmatprep.subr.bf16.mxu0 0
        %550 = vmatpush1.bf16.msra.mxu0 %v540
        %551 = vmatprep.subr.bf16.mxu0 0
        %552 = vmatpush1.bf16.msra.mxu0 %v539
        %553 = vmatprep.subr.bf16.mxu0 0
        %554 = vmatpush1.bf16.msra.mxu0 %v538
        %555 = vmatprep.subr.bf16.mxu0 0
        %556 = vmatpush1.bf16.msra.mxu0 %v537
        %557 = vmatprep.subr.bf16.mxu0 0
        %558 = vmatpush1.bf16.msra.mxu0 %v536
        %559 = vmatprep.subr.bf16.mxu0 0
        %560 = vmatpush1.bf16.msra.mxu0 %v535
        %561 = vmatprep.subr.bf16.mxu0 0
        %562 = vmatpush1.bf16.msra.mxu0 %v534
        %563 = vmatprep.subr.bf16.mxu0 0
        %564 = vmatpush1.bf16.msra.mxu0 %v533
        %565 = vmatprep.subr.bf16.mxu0 0
        %566 = vmatpush2.bf16.msra.mxu0 0
        %567 = vmatprep.subr.bf16.mxu0 0
        %568 = vmatpush2.bf16.msra.mxu0 0
        %569 = vmatprep.subr.bf16.mxu0 0
        %570 = vmatpush2.bf16.msra.mxu0 0
        %571 = vmatprep.subr.bf16.mxu0 0
        %572 = vmatpush2.bf16.msra.mxu0 0
        %573 = vmatprep.subr.bf16.mxu0 0
        %574 = vmatpush2.bf16.msra.mxu0 0
        %575 = vmatprep.subr.bf16.mxu0 0
        %576 = vmatpush2.bf16.msra.mxu0 0
        %577 = vmatprep.subr.bf16.mxu0 0
        %578 = vmatpush2.bf16.msra.mxu0 0
        %579 = vmatprep.subr.bf16.mxu0 0
        %580 = vmatpush2.bf16.msra.mxu0 0
        %581 = vmatprep.mubr.bf16.mxu0 0
        %582 = vmatmul.mubr.bf16.gmra.mxu0 %v476
        %v583 = vpop.f32.mrf.mxu0
        %v584 = vadd.f32 %v499, %v583
        %v585 = vpop.f32.mrf.mxu0
        %v586 = vpop.f32.mrf.mxu0
        %v587 = vadd.f32 %v499, %v586
        %v588 = vpop.f32.mrf.mxu0
        %589 = vmatprep.mubr.bf16.mxu0 0
        %590 = vmatmul.mubr.bf16.gmra.mxu0 %v477
        %v591 = vpop.f32.mrf.mxu0
        %v592 = vadd.f32 %v499, %v591
        %v593 = vpop.f32.mrf.mxu0
        %v594 = vpop.f32.mrf.mxu0
        %v595 = vadd.f32 %v499, %v594
        %v596 = vpop.f32.mrf.mxu0
        %597 = vdwg.mxu0
        %v598 = vmax.f32 %v584, 0.0
        %v599 = vmax.f32 %v587, 0.0
        %v600 = vmax.f32 %v592, 0.0
        %v601 = vmax.f32 %v595, 0.0
        %v602 = vpack.c.bf16 %v599, %v598
        %v603 = vpack.c.bf16 %v601, %v600
        %v604 = vld [vmem:[#allocation5] sm:$0xf]
        %v605 = vld [vmem:[#allocation5 + $0x4] sm:$0xf]
        %v606 = vld [vmem:[#allocation5 + $0x8] sm:$0xf]
        %v607 = vld [vmem:[#allocation5 + $0xc] sm:$0xf]
        %v608 = vld [vmem:[#allocation5 + $0x10] sm:$0xf]
        %v609 = vld [vmem:[#allocation5 + $0x14] sm:$0xf]
        %v610 = vld [vmem:[#allocation5 + $0x18] sm:$0xf]
        %v611 = vld [vmem:[#allocation5 + $0x1c] sm:$0xf]
        %v612 = vld [vmem:[#allocation5 + $0x20] sm:$0xf]
        %v613 = vld [vmem:[#allocation5 + $0x24] sm:$0xf]
        %v614 = vld [vmem:[#allocation5 + $0x28] sm:$0xf]
        %v615 = vld [vmem:[#allocation5 + $0x2c] sm:$0xf]
        %v616 = vld [vmem:[#allocation5 + $0x30] sm:$0xf]
        %v617 = vld [vmem:[#allocation5 + $0x34] sm:$0xf]
        %v618 = vld [vmem:[#allocation5 + $0x38] sm:$0xf]
        %v619 = vld [vmem:[#allocation5 + $0x3c] sm:$0xf]
        %v620 = vld [vmem:[%s6] sm:$0x1]
        %v622 = vlaneseq
        %v623 = vshrl.u32 %v622, 7
        %v624 = vsub.s32 0, %v623
        %v625 = vrot.slane %v620, %v624
        %v643 = vunpack.c.l.b16 %v604
        %v644 = vunpack.c.l.b16 %v605
        %v645 = vunpack.c.l.b16 %v606
        %v646 = vunpack.c.l.b16 %v607
        %v647 = vunpack.c.l.b16 %v608
        %v648 = vunpack.c.l.b16 %v609
        %v649 = vunpack.c.l.b16 %v610
        %v650 = vunpack.c.l.b16 %v611
        %v651 = vunpack.c.l.b16 %v612
        %v652 = vunpack.c.l.b16 %v613
        %v653 = vunpack.c.l.b16 %v614
        %v654 = vunpack.c.l.b16 %v615
        %v655 = vunpack.c.l.b16 %v616
        %v656 = vunpack.c.l.b16 %v617
        %v657 = vunpack.c.l.b16 %v618
        %v658 = vunpack.c.l.b16 %v619
        %v659 = vpack.c.b16 %v644, %v643
        %v660 = vpack.c.b16 %v646, %v645
        %v661 = vpack.c.b16 %v648, %v647
        %v662 = vpack.c.b16 %v650, %v649
        %v663 = vpack.c.b16 %v652, %v651
        %v664 = vpack.c.b16 %v654, %v653
        %v665 = vpack.c.b16 %v656, %v655
        %v666 = vpack.c.b16 %v658, %v657
        %675 = vmatprep.subr.bf16.mxu0 0
        %676 = vmatpush1.bf16.msra.mxu0 %v666
        %677 = vmatprep.subr.bf16.mxu0 0
        %678 = vmatpush1.bf16.msra.mxu0 %v665
        %679 = vmatprep.subr.bf16.mxu0 0
        %680 = vmatpush1.bf16.msra.mxu0 %v664
        %681 = vmatprep.subr.bf16.mxu0 0
        %682 = vmatpush1.bf16.msra.mxu0 %v663
        %683 = vmatprep.subr.bf16.mxu0 0
        %684 = vmatpush1.bf16.msra.mxu0 %v662
        %685 = vmatprep.subr.bf16.mxu0 0
        %686 = vmatpush1.bf16.msra.mxu0 %v661
        %687 = vmatprep.subr.bf16.mxu0 0
        %688 = vmatpush1.bf16.msra.mxu0 %v660
        %689 = vmatprep.subr.bf16.mxu0 0
        %690 = vmatpush1.bf16.msra.mxu0 %v659
        %691 = vmatprep.subr.bf16.mxu0 0
        %692 = vmatpush2.bf16.msra.mxu0 0
        %693 = vmatprep.subr.bf16.mxu0 0
        %694 = vmatpush2.bf16.msra.mxu0 0
        %695 = vmatprep.subr.bf16.mxu0 0
        %696 = vmatpush2.bf16.msra.mxu0 0
        %697 = vmatprep.subr.bf16.mxu0 0
        %698 = vmatpush2.bf16.msra.mxu0 0
        %699 = vmatprep.subr.bf16.mxu0 0
        %700 = vmatpush2.bf16.msra.mxu0 0
        %701 = vmatprep.subr.bf16.mxu0 0
        %702 = vmatpush2.bf16.msra.mxu0 0
        %703 = vmatprep.subr.bf16.mxu0 0
        %704 = vmatpush2.bf16.msra.mxu0 0
        %705 = vmatprep.subr.bf16.mxu0 0
        %706 = vmatpush2.bf16.msra.mxu0 0
        %707 = vmatprep.mubr.bf16.mxu0 0
        %708 = vmatmul.mubr.bf16.gmra.mxu0 %v602
        %v709 = vpop.f32.mrf.mxu0
        %v710 = vadd.f32 %v625, %v709
        %v711 = vpop.f32.mrf.mxu0
        %v712 = vpop.f32.mrf.mxu0
        %v713 = vadd.f32 %v625, %v712
        %v714 = vpop.f32.mrf.mxu0
        %715 = vmatprep.mubr.bf16.mxu0 0
        %716 = vmatmul.mubr.bf16.gmra.mxu0 %v603
        %v717 = vpop.f32.mrf.mxu0
        %v718 = vadd.f32 %v625, %v717
        %v719 = vpop.f32.mrf.mxu0
        %v720 = vpop.f32.mrf.mxu0
        %v721 = vadd.f32 %v625, %v720
        %v722 = vpop.f32.mrf.mxu0
        %723 = vdwg.mxu0
        %v724 = vmax.f32 %v710, 0.0
        %v725 = vmax.f32 %v713, 0.0
        %v726 = vmax.f32 %v718, 0.0
        %v727 = vmax.f32 %v721, 0.0
        %v728 = vpack.c.bf16 %v725, %v724
        %v729 = vpack.c.bf16 %v727, %v726
        %v730 = vld [vmem:[#allocation7] sm:$0xf]
        %v731 = vld [vmem:[#allocation7 + $0x4] sm:$0xf]
        %v732 = vld [vmem:[#allocation7 + $0x8] sm:$0xf]
        %v733 = vld [vmem:[#allocation7 + $0xc] sm:$0xf]
        %v734 = vld [vmem:[#allocation7 + $0x10] sm:$0xf]
        %v735 = vld [vmem:[#allocation7 + $0x14] sm:$0xf]
        %v736 = vld [vmem:[#allocation7 + $0x18] sm:$0xf]
        %v737 = vld [vmem:[#allocation7 + $0x1c] sm:$0xf]
        %v738 = vld [vmem:[#allocation7 + $0x20] sm:$0xf]
        %v739 = vld [vmem:[#allocation7 + $0x24] sm:$0xf]
        %v740 = vld [vmem:[#allocation7 + $0x28] sm:$0xf]
        %v741 = vld [vmem:[#allocation7 + $0x2c] sm:$0xf]
        %v742 = vld [vmem:[#allocation7 + $0x30] sm:$0xf]
        %v743 = vld [vmem:[#allocation7 + $0x34] sm:$0xf]
        %v744 = vld [vmem:[#allocation7 + $0x38] sm:$0xf]
        %v745 = vld [vmem:[#allocation7 + $0x3c] sm:$0xf]
        %v746 = vld [vmem:[%s8] sm:$0x1]
        %v748 = vlaneseq
        %v749 = vshrl.u32 %v748, 7
        %v750 = vsub.s32 0, %v749
        %v751 = vrot.slane %v746, %v750
        %v769 = vunpack.c.l.b16 %v730
        %v770 = vunpack.c.l.b16 %v731
        %v771 = vunpack.c.l.b16 %v732
        %v772 = vunpack.c.l.b16 %v733
        %v773 = vunpack.c.l.b16 %v734
        %v774 = vunpack.c.l.b16 %v735
        %v775 = vunpack.c.l.b16 %v736
        %v776 = vunpack.c.l.b16 %v737
        %v777 = vunpack.c.l.b16 %v738
        %v778 = vunpack.c.l.b16 %v739
        %v779 = vunpack.c.l.b16 %v740
        %v780 = vunpack.c.l.b16 %v741
        %v781 = vunpack.c.l.b16 %v742
        %v782 = vunpack.c.l.b16 %v743
        %v783 = vunpack.c.l.b16 %v744
        %v784 = vunpack.c.l.b16 %v745
        %v785 = vpack.c.b16 %v770, %v769
        %v786 = vpack.c.b16 %v772, %v771
        %v787 = vpack.c.b16 %v774, %v773
        %v788 = vpack.c.b16 %v776, %v775
        %v789 = vpack.c.b16 %v778, %v777
        %v790 = vpack.c.b16 %v780, %v779
        %v791 = vpack.c.b16 %v782, %v781
        %v792 = vpack.c.b16 %v784, %v783
        %801 = vmatprep.subr.bf16.mxu0 0
        %802 = vmatpush1.bf16.msra.mxu0 %v792
        %803 = vmatprep.subr.bf16.mxu0 0
        %804 = vmatpush1.bf16.msra.mxu0 %v791
        %805 = vmatprep.subr.bf16.mxu0 0
        %806 = vmatpush1.bf16.msra.mxu0 %v790
        %807 = vmatprep.subr.bf16.mxu0 0
        %808 = vmatpush1.bf16.msra.mxu0 %v789
        %809 = vmatprep.subr.bf16.mxu0 0
        %810 = vmatpush1.bf16.msra.mxu0 %v788
        %811 = vmatprep.subr.bf16.mxu0 0
        %812 = vmatpush1.bf16.msra.mxu0 %v787
        %813 = vmatprep.subr.bf16.mxu0 0
        %814 = vmatpush1.bf16.msra.mxu0 %v786
        %815 = vmatprep.subr.bf16.mxu0 0
        %816 = vmatpush1.bf16.msra.mxu0 %v785
        %817 = vmatprep.subr.bf16.mxu0 0
        %818 = vmatpush2.bf16.msra.mxu0 0
        %819 = vmatprep.subr.bf16.mxu0 0
        %820 = vmatpush2.bf16.msra.mxu0 0
        %821 = vmatprep.subr.bf16.mxu0 0
        %822 = vmatpush2.bf16.msra.mxu0 0
        %823 = vmatprep.subr.bf16.mxu0 0
        %824 = vmatpush2.bf16.msra.mxu0 0
        %825 = vmatprep.subr.bf16.mxu0 0
        %826 = vmatpush2.bf16.msra.mxu0 0
        %827 = vmatprep.subr.bf16.mxu0 0
        %828 = vmatpush2.bf16.msra.mxu0 0
        %829 = vmatprep.subr.bf16.mxu0 0
        %830 = vmatpush2.bf16.msra.mxu0 0
        %831 = vmatprep.subr.bf16.mxu0 0
        %832 = vmatpush2.bf16.msra.mxu0 0
        %833 = vmatprep.mubr.bf16.mxu0 0
        %834 = vmatmul.mubr.bf16.gmra.mxu0 %v728
        %v835 = vpop.f32.mrf.mxu0
        %v836 = vadd.f32 %v751, %v835
        %v837 = vpop.f32.mrf.mxu0
        %v838 = vpop.f32.mrf.mxu0
        %v839 = vadd.f32 %v751, %v838
        %v840 = vpop.f32.mrf.mxu0
        %841 = vmatprep.mubr.bf16.mxu0 0
        %842 = vmatmul.mubr.bf16.gmra.mxu0 %v729
        %v843 = vpop.f32.mrf.mxu0
        %v844 = vadd.f32 %v751, %v843
        %v845 = vpop.f32.mrf.mxu0
        %v846 = vpop.f32.mrf.mxu0
        %v847 = vadd.f32 %v751, %v846
        %v848 = vpop.f32.mrf.mxu0
        %849 = vdwg.mxu0
        %v850 = vsub.f32 0.0, %v836
        %v851 = vsub.f32 0.0, %v839
        %v852 = vsub.f32 0.0, %v844
        %v853 = vsub.f32 0.0, %v847
        %v854 = vmul.f32 %v850, 1.442695
        %v855 = vpow.pop %v854
        %v856 = vmul.f32 %v851, 1.442695
        %v857 = vpow.pop %v856
        %v858 = vmul.f32 %v852, 1.442695
        %v859 = vpow.pop %v858
        %v860 = vmul.f32 %v853, 1.442695
        %v861 = vpow.pop %v860
        %v862 = vadd.f32 %v855, 1.0
        %v863 = vadd.f32 %v857, 1.0
        %v864 = vadd.f32 %v859, 1.0
        %v865 = vadd.f32 %v861, 1.0
        %v866 = vrcp.pop %v862
        %v867 = vrcp.pop %v863
        %v868 = vrcp.pop %v864
        %v869 = vrcp.pop %v865
        %v870 = vpack.c.bf16 %v867, %v866
        %v871 = vpack.c.bf16 %v869, %v868
        %v874 = vunpack.c.l.b16 %v870
        %v875 = vunpack.c.h.b16 %v870
        %v876 = vunpack.c.l.b16 %v871
        %v877 = vunpack.c.h.b16 %v871
        %v878 = vpack.c.b16 %v874, %v874
        %v879 = vpack.c.b16 %v875, %v875
        %v880 = vpack.c.b16 %v876, %v876
        %v881 = vpack.c.b16 %v877, %v877
        %886 = vst [vmem:[%s370] sm:$0xf] %v878
        %887 = vst [vmem:[%s370 + $0x4] sm:$0xf] %v879
        %888 = vst [vmem:[%s370 + $0x8] sm:$0xf] %v880
        %889 = vst [vmem:[%s370 + $0xc] sm:$0xf] %v881
        %s890 = sand.u32 %s227, 1
        %s891 = scalar_lea.sflag [#allocation4], %s890
        %s892 = sand.u32 %s227, 1
        %s893 = smul.addr %s892, 16
        %s894 = scalar_lea.vmem [#allocation8], %s893
        // Predicated region
        $region69: #{tpu_custom_call.1} parent=55 // pred_check
          %p895 = pneg %p237
        $region70: #{tpu_custom_call.1} parent=55 // pred_check_branch
          %897 = sbr.rel (%p895) target = $region72
        $region71: #{tpu_custom_call.1} parent=55 // pred_region
          %s898 = smul.u32 4, %s25
          %s900 = ssub.s32 256, 256
          %901 = vsyncadd %s891, %s900
          %s902 = smul.addr %s898, 64
          %s903 = scalar_lea.hbm %s9, %s902
          %s904 = sshll.u32 %s894, 4
          %s905 = int_to_ptr.vmem [resolvable:$true] %s904
          %910 = dma.vmem_to_hbm [thread:$0]  %s905, 256, %s903, %s891, 64, 64, 4
        $region72: #{tpu_custom_call.1} parent=55 // pred_fallthru
          _
      $region56: #{tpu_custom_call.1} parent=5 // pred_fallthru
        _
      %p911 = scmp.le.s32.totalorder 2, %s20
      // Predicated region
      $region73: #{tpu_custom_call.1} parent=5 // pred_check
        %p912 = pneg %p911
      $region74: #{tpu_custom_call.1} parent=5 // pred_check_branch
        %914 = sbr.rel (%p912) target = $region76
      $region75: #{tpu_custom_call.1} parent=5 // pred_region
        %s915 = ssub.s32 %s20, 2
        // Predicated region
        $region77: #{tpu_custom_call.1} parent=75 // pred_check
          %p916 = pneg %p243
        $region78: #{tpu_custom_call.1} parent=75 // pred_check_branch
          %918 = sbr.rel (%p916) target = $region80
        $region79: #{tpu_custom_call.1} parent=75 // pred_region
          %s919 = sand.u32 %s228, 1
          %s920 = scalar_lea.sflag [#allocation4], %s919
          %s921 = sand.u32 %s228, 1
          %s922 = smul.addr %s921, 16
          %s923 = scalar_lea.vmem [#allocation8], %s922
          %924 = dma.done %s920, 256
        $region80: #{tpu_custom_call.1} parent=75 // pred_fallthru
          _
      $region76: #{tpu_custom_call.1} parent=5 // pred_fallthru
        _
    $region6: #{tpu_custom_call.1} parent=1 // loop_footer
      %s24 = sadd.s32 1, %s20
    $region7: #{tpu_custom_call.1} parent=1 // loop_footer_branch
      %19 = sbr.rel target = $region3
    $region8: #{tpu_custom_call.1} parent=1 // loop_exit
      _
    %925 = vsyncpa [#allocation3], 1
    %s926 = scalar_lea.sflag [#allocation3], 1
    %927 = vsyncpa %s926, 1
    %928 = vsyncpa [#allocation6], 1
    %929 = vsyncpa [#allocation4], 1
    %s930 = scalar_lea.sflag [#allocation4], 1
    %931 = vsyncpa %s930, 1

</llo_original>
